<compile_context>
chip_gen: v7x
topology: tpu7x:2x2x1
jax: 0.10.0
libtpu: 0.0.40
codegen_flags: <defaults>
</compile_context>

<pallas_src>
import functools

import jax
import jax.numpy as jnp
from jax.experimental import pallas as pl
from jax.experimental.pallas import tpu as pltpu


def _supcon_kernel(fq_ref, fk_ref, lq_ref, lk_ref, out_ref,
                   m_ref, l_ref, s_ref, c_ref, *, b_real):
    i = pl.program_id(0)              # query-tile index (parallel)
    k = pl.program_id(1)              # key-tile index (streamed reduction)
    nk = pl.num_programs(1)
    tq = fq_ref.shape[0]
    tk = fk_ref.shape[0]

    @pl.when(k == 0)
    def _init():
        m_ref[...] = jnp.full_like(m_ref, -jnp.inf)
        l_ref[...] = jnp.zeros_like(l_ref)
        s_ref[...] = jnp.zeros_like(s_ref)
        c_ref[...] = jnp.zeros_like(c_ref)

    # --- similarity on the MXU: pre-normalized bf16 inputs (query side already
    #     carries 1/temperature), f32 accumulation, contract feature dims
    #     directly (no transpose / XLU work). ---------------------------------
    sim = jax.lax.dot_general(
        fq_ref[...], fk_ref[...],
        dimension_numbers=(((1,), (1,)), ((), ())),
        preferred_element_type=jnp.float32)                     # (TQ, TK)

    # --- masks from global row/col indices: drop self pairs & padded columns -
    row_g = i * tq + jax.lax.broadcasted_iota(jnp.int32, (tq, tk), 0)
    col_g = k * tk + jax.lax.broadcasted_iota(jnp.int32, (tq, tk), 1)
    valid = jnp.logical_and(row_g != col_g, col_g < b_real)
    pos = jnp.logical_and(lq_ref[...] == lk_ref[...], valid).astype(jnp.float32)

    # --- online log-sum-exp over key tiles (softmax denominator) ------------
    m_prev = m_ref[...]
    m_new = jnp.maximum(m_prev, jnp.max(sim, axis=1, keepdims=True))
    alpha = jnp.exp(m_prev - m_new)                 # 0 on the first key tile
    p = jnp.exp(sim - m_new) * valid.astype(jnp.float32)
    l_ref[...] = alpha * l_ref[...] + jnp.sum(p, axis=1, keepdims=True)
    m_ref[...] = m_new

    # --- running numerator: sum(mask * sim) and positive counts -------------
    s_ref[...] += jnp.sum(pos * sim, axis=1, keepdims=True)
    c_ref[...] += jnp.sum(pos, axis=1, keepdims=True)

    # --- finalize on the last key tile ---------------------------------------
    @pl.when(k == nk - 1)
    def _fin():
        lse = m_ref[...] + jnp.log(l_ref[...])      # log sum_{j!=i} exp(sim_ij)
        cnt = c_ref[...]
        # sum(mask*log_prob) = sum(mask*sim) - cnt*lse ; exact divide, rows with
        # no positives (incl. padded rows) are clamped to 0 instead of NaN.
        # TODO(synk): the PyTorch reference yields NaN for rows with zero positives.
        mlpp = (s_ref[...] - cnt * lse) / jnp.maximum(cnt, 1.0)
        row_valid = (i * tq +
                     jax.lax.broadcasted_iota(jnp.int32, (tq, 1), 0)) < b_real
        tile_sum = jnp.sum(jnp.where(row_valid, mlpp, 0.0))     # scalar per tile
        out_ref[...] = jnp.broadcast_to(tile_sum.reshape(1, 1, 1), out_ref.shape)


def _round_up(x, m):
    return ((x + m - 1) // m) * m


def _largest_tile(n, step, cap):
    """Largest multiple of `step` that divides n and is <= cap (assumes step | n)."""
    t = min(cap, n)
    t -= t % step
    while t > step:
        if n % t == 0:
            return t
        t -= step
    return step


def _vmem_limit_bytes():
    cap = None
    try:
        cap = getattr(pltpu.get_tpu_info(), "vmem_capacity_bytes", None)
    except Exception:
        cap = None
    if not cap:
        cap = 64 * 1024 * 1024                      # conservative (v7x per-TC)
    # Half of physical capacity, never below 32 MiB, always leave headroom.
    return int(min(max(cap // 2, 32 * 1024 * 1024), cap - 8 * 1024 * 1024))


def supcon_loss(features, labels, temperature=0.07):
    """features: (B, D) float (f32 or bf16), labels: (B,) int. Returns scalar loss."""
    b, d = features.shape
    inv_temp = 1.0 / temperature

    # --- normalize ONCE in f32 (matches F.normalize's max(||x||, 1e-12)),
    #     store bf16, fold 1/temperature into the query-side copy. ------------
    f32 = features.astype(jnp.float32)
    fn = f32 * jax.lax.rsqrt(
        jnp.maximum(jnp.sum(f32 * f32, axis=1, keepdims=True), 1e-24))
    labels = labels.astype(jnp.int32)

    # --- pad batch to a multiple of 128 so every tile is (8,128)-aligned -----
    b_pad = _round_up(b, 128)
    if b_pad != b:
        fn = jnp.pad(fn, ((0, b_pad - b), (0, 0)))
        labels = jnp.pad(labels, (0, b_pad - b), constant_values=-1)

    fq = (fn * inv_temp).astype(jnp.bfloat16)       # query side (1/T folded)
    fk = fn.astype(jnp.bfloat16)                    # key side (re-streamed)
    lab_col = labels.reshape(b_pad, 1)
    lab_row = labels.reshape(1, b_pad)

    # --- tiles: TQ up to 256 but keep >=2 query tiles (v7x megacore);
    #     TK up to 1024, lane-aligned. ----------------------------------------
    tq = _largest_tile(b_pad, 8, min(256, b_pad // 2))
    tk = _largest_tile(b_pad, 128, 1024)
    nq, nk = b_pad // tq, b_pad // tk

    grid_spec = pltpu.PrefetchScalarGridSpec(
        num_scalar_prefetch=0,
        grid=(nq, nk),
        in_specs=[
            pl.BlockSpec((tq, d), lambda i, k: (i, 0)),   # query features (bf16)
            pl.BlockSpec((tk, d), lambda i, k: (k, 0)),   # key features (streamed)
            pl.BlockSpec((tq, 1), lambda i, k: (i, 0)),   # labels, column layout
            pl.BlockSpec((1, tk), lambda i, k: (0, k)),   # labels, row layout
        ],
        out_specs=pl.BlockSpec((1, 8, 128), lambda i, k: (i, 0, 0)),
        scratch_shapes=[pltpu.VMEM((tq, 1), jnp.float32)] * 4,   # m, l, sum, cnt
    )
    out = pl.pallas_call(
        functools.partial(_supcon_kernel, b_real=b),
        out_shape=jax.ShapeDtypeStruct((nq, 8, 128), jnp.float32),
        grid_spec=grid_spec,
        compiler_params=pltpu.CompilerParams(
            dimension_semantics=("parallel", "arbitrary"),
            vmem_limit_bytes=_vmem_limit_bytes(),
        ),
    )(fq, fk, lab_col, lab_row)
    # loss = -(sum over valid rows of mean_log_prob_pos) / B
    return -jnp.sum(out[:, 0, 0]) / b


def _supcon_ref(features, labels, temperature=0.07):
    f = features.astype(jnp.float32)
    fn = f / jnp.maximum(jnp.sqrt(jnp.sum(f * f, axis=1, keepdims=True)), 1e-12)
    sim = (fn @ fn.T) / temperature
    eye = jnp.eye(labels.shape[0], dtype=jnp.float32)
    mask = (labels[:, None] == labels[None, :]).astype(jnp.float32) * (1.0 - eye)
    exp_logits = jnp.exp(sim) * (1.0 - eye)
    log_prob = sim - jnp.log(jnp.sum(exp_logits, axis=1, keepdims=True))
    mlpp = jnp.sum(mask * log_prob, axis=1) / jnp.sum(mask, axis=1)
    return -jnp.mean(mlpp)


if __name__ == "__main__":
    B, D = 8, 512  # module's forward expects (batch_size, 512) features
    key = jax.random.PRNGKey(0)
    features = jax.random.normal(key, (B, D), dtype=jnp.float32)
    # deterministic binary labels (both classes present so every row has positives)
    labels = jnp.array([0, 1, 0, 1, 0, 1, 0, 1], dtype=jnp.int32)

    loss = supcon_loss(features, labels, temperature=0.07)
    jax.block_until_ready(loss)

    ref = _supcon_ref(features, labels, temperature=0.07)
    # bf16 MXU inputs with f32 accumulation -> compare at bf16-level tolerance.
    assert jnp.allclose(loss, ref, atol=2e-2, rtol=2e-2), (loss, ref)
    print("KERNEL_OK")
</pallas_src>

<mosaic_0001>
module attributes {stable_mosaic.version = 11 : i64} {
  func.func @_supcon_kernel(%arg0: i32, %arg1: i32, %arg2: memref<64x512xbf16, #tpu.memory_space<vmem>>, %arg3: memref<128x512xbf16, #tpu.memory_space<vmem>>, %arg4: memref<64x1xi32, #tpu.memory_space<vmem>>, %arg5: memref<1x128xi32, #tpu.memory_space<vmem>>, %arg6: memref<1x8x128xf32, #tpu.memory_space<vmem>>, %arg7: memref<64x1xf32, #tpu.memory_space<vmem>>, %arg8: memref<64x1xf32, #tpu.memory_space<vmem>>, %arg9: memref<64x1xf32, #tpu.memory_space<vmem>>, %arg10: memref<64x1xf32, #tpu.memory_space<vmem>>) attributes {dimension_semantics = [#tpu.dimension_semantics<parallel>, #tpu.dimension_semantics<arbitrary>], iteration_bounds = array<i64: 2, 1>, scalar_prefetch = 0 : i64, scratch_operands = 4 : i64, tpu.core_type = #tpu.core_type<tc>, window_params = [{transform_indices = @transform_0, window_bounds = array<i64: 64, 512>}, {transform_indices = @transform_1, window_bounds = array<i64: 128, 512>}, {transform_indices = @transform_2, window_bounds = array<i64: 64, 1>}, {transform_indices = @transform_3, window_bounds = array<i64: 1, 128>}, {transform_indices = @transform_4, window_bounds = array<i64: 1, 8, 128>}]} {
    %c0_i32 = arith.constant 0 : i32
    %0 = arith.cmpi eq, %arg1, %c0_i32 : i32
    %1 = arith.extui %0 : i1 to i32
    %c0_i32_0 = arith.constant 0 : i32
    %2 = arith.cmpi ne, %1, %c0_i32_0 : i32
    scf.if %2 {
      %cst_30 = arith.constant 0xFF800000 : f32
      %59 = vector.broadcast %cst_30 : f32 to vector<64x1xf32>
      %c0_31 = arith.constant 0 : index
      %c0_32 = arith.constant 0 : index
      %60 = vector.load %arg7[%c0_31, %c0_32] : memref<64x1xf32, #tpu.memory_space<vmem>>, vector<64x1xf32>
      tpu.vector_store %arg7[%c0_31, %c0_32], %59 {strides = array<i32>} : memref<64x1xf32, #tpu.memory_space<vmem>>, vector<64x1xf32>,
      %cst_33 = arith.constant 0.000000e+00 : f32
      %61 = vector.broadcast %cst_33 : f32 to vector<64x1xf32>
      %c0_34 = arith.constant 0 : index
      %c0_35 = arith.constant 0 : index
      %62 = vector.load %arg8[%c0_34, %c0_35] : memref<64x1xf32, #tpu.memory_space<vmem>>, vector<64x1xf32>
      tpu.vector_store %arg8[%c0_34, %c0_35], %61 {strides = array<i32>} : memref<64x1xf32, #tpu.memory_space<vmem>>, vector<64x1xf32>,
      %cst_36 = arith.constant 0.000000e+00 : f32
      %63 = vector.broadcast %cst_36 : f32 to vector<64x1xf32>
      %c0_37 = arith.constant 0 : index
      %c0_38 = arith.constant 0 : index
      %64 = vector.load %arg9[%c0_37, %c0_38] : memref<64x1xf32, #tpu.memory_space<vmem>>, vector<64x1xf32>
      tpu.vector_store %arg9[%c0_37, %c0_38], %63 {strides = array<i32>} : memref<64x1xf32, #tpu.memory_space<vmem>>, vector<64x1xf32>,
      %cst_39 = arith.constant 0.000000e+00 : f32
      %65 = vector.broadcast %cst_39 : f32 to vector<64x1xf32>
      %c0_40 = arith.constant 0 : index
      %c0_41 = arith.constant 0 : index
      %66 = vector.load %arg10[%c0_40, %c0_41] : memref<64x1xf32, #tpu.memory_space<vmem>>, vector<64x1xf32>
      tpu.vector_store %arg10[%c0_40, %c0_41], %65 {strides = array<i32>} : memref<64x1xf32, #tpu.memory_space<vmem>>, vector<64x1xf32>,
    } else {
    }
    %c0 = arith.constant 0 : index
    %c0_1 = arith.constant 0 : index
    %3 = vector.load %arg2[%c0, %c0_1] : memref<64x512xbf16, #tpu.memory_space<vmem>>, vector<64x512xbf16>
    %c0_2 = arith.constant 0 : index
    %c0_3 = arith.constant 0 : index
    %4 = vector.load %arg3[%c0_2, %c0_3] : memref<128x512xbf16, #tpu.memory_space<vmem>>, vector<128x512xbf16>
    %cst = arith.constant dense<0.000000e+00> : vector<64x128xf32>
    %5 = tpu.matmul %3, %4, %cst {dimension_numbers = #tpu.dot_dimension_numbers<[1], [1], [0], [0], [0, 0, 1, 0], [], []>} : vector<64x512xbf16>, vector<128x512xbf16>, vector<64x128xf32> -> vector<64x128xf32>
    %c64_i32 = arith.constant 64 : i32
    %6 = arith.muli %arg0, %c64_i32 : i32
    %7 = tpu.iota {dimensions = array<i32: 0>} : vector<64x128xi32>
    %8 = vector.broadcast %6 : i32 to vector<64x128xi32>
    %9 = arith.addi %8, %7 : vector<64x128xi32>
    %c128_i32 = arith.constant 128 : i32
    %10 = arith.muli %arg1, %c128_i32 : i32
    %11 = tpu.iota {dimensions = array<i32: 1>} : vector<64x128xi32>
    %12 = vector.broadcast %10 : i32 to vector<64x128xi32>
    %13 = arith.addi %12, %11 : vector<64x128xi32>
    %14 = arith.cmpi ne, %9, %13 : vector<64x128xi32>
    %c8_i32 = arith.constant 8 : i32
    %15 = vector.broadcast %c8_i32 : i32 to vector<64x128xi32>
    %16 = arith.cmpi slt, %13, %15 : vector<64x128xi32>
    %17 = arith.andi %14, %16 : vector<64x128xi1>
    %c0_4 = arith.constant 0 : index
    %c0_5 = arith.constant 0 : index
    %18 = vector.load %arg4[%c0_4, %c0_5] : memref<64x1xi32, #tpu.memory_space<vmem>>, vector<64x1xi32>
    %c0_6 = arith.constant 0 : index
    %c0_7 = arith.constant 0 : index
    %19 = vector.load %arg5[%c0_6, %c0_7] : memref<1x128xi32, #tpu.memory_space<vmem>>, vector<1x128xi32>
    %20 = vector.broadcast %18 : vector<64x1xi32> to vector<64x128xi32>
    %21 = vector.broadcast %19 : vector<1x128xi32> to vector<64x128xi32>
    %22 = arith.cmpi eq, %20, %21 : vector<64x128xi32>
    %23 = arith.andi %22, %17 : vector<64x128xi1>
    %24 = arith.extui %23 : vector<64x128xi1> to vector<64x128xi32>
    %25 = arith.sitofp %24 : vector<64x128xi32> to vector<64x128xf32>
    %c0_8 = arith.constant 0 : index
    %c0_9 = arith.constant 0 : index
    %26 = vector.load %arg7[%c0_8, %c0_9] : memref<64x1xf32, #tpu.memory_space<vmem>>, vector<64x1xf32>
    %cst_10 = arith.constant dense<0xFF800000> : vector<64xf32>
    %27 = vector.multi_reduction <maximumf>, %5, %cst_10 [1] : vector<64x128xf32> to vector<64xf32>
    %28 = vector.shape_cast %27 : vector<64xf32> to vector<64x1xf32>
    %29 = arith.maximumf %26, %28 : vector<64x1xf32>
    %30 = arith.subf %26, %29 : vector<64x1xf32>
    %31 = math.exp %30 : vector<64x1xf32>
    %32 = vector.broadcast %29 : vector<64x1xf32> to vector<64x128xf32>
    %33 = arith.subf %5, %32 : vector<64x128xf32>
    %34 = math.exp %33 : vector<64x128xf32>
    %35 = arith.extui %17 : vector<64x128xi1> to vector<64x128xi32>
    %36 = arith.sitofp %35 : vector<64x128xi32> to vector<64x128xf32>
    %37 = arith.mulf %34, %36 : vector<64x128xf32>
    %c0_11 = arith.constant 0 : index
    %c0_12 = arith.constant 0 : index
    %38 = vector.load %arg8[%c0_11, %c0_12] : memref<64x1xf32, #tpu.memory_space<vmem>>, vector<64x1xf32>
    %39 = arith.mulf %31, %38 : vector<64x1xf32>
    %cst_13 = arith.constant dense<0.000000e+00> : vector<64xf32>
    %40 = vector.multi_reduction <add>, %37, %cst_13 [1] : vector<64x128xf32> to vector<64xf32>
    %41 = vector.shape_cast %40 : vector<64xf32> to vector<64x1xf32>
    %42 = arith.addf %39, %41 : vector<64x1xf32>
    %c0_14 = arith.constant 0 : index
    %c0_15 = arith.constant 0 : index
    %43 = vector.load %arg8[%c0_14, %c0_15] : memref<64x1xf32, #tpu.memory_space<vmem>>, vector<64x1xf32>
    tpu.vector_store %arg8[%c0_14, %c0_15], %42 {strides = array<i32>} : memref<64x1xf32, #tpu.memory_space<vmem>>, vector<64x1xf32>,
    %c0_16 = arith.constant 0 : index
    %c0_17 = arith.constant 0 : index
    %44 = vector.load %arg7[%c0_16, %c0_17] : memref<64x1xf32, #tpu.memory_space<vmem>>, vector<64x1xf32>
    tpu.vector_store %arg7[%c0_16, %c0_17], %29 {strides = array<i32>} : memref<64x1xf32, #tpu.memory_space<vmem>>, vector<64x1xf32>,
    %c0_18 = arith.constant 0 : index
    %c0_19 = arith.constant 0 : index
    %45 = vector.load %arg9[%c0_18, %c0_19] : memref<64x1xf32, #tpu.memory_space<vmem>>, vector<64x1xf32>
    %46 = arith.mulf %25, %5 : vector<64x128xf32>
    %cst_20 = arith.constant dense<0.000000e+00> : vector<64xf32>
    %47 = vector.multi_reduction <add>, %46, %cst_20 [1] : vector<64x128xf32> to vector<64xf32>
    %48 = vector.shape_cast %47 : vector<64xf32> to vector<64x1xf32>
    %49 = arith.addf %45, %48 : vector<64x1xf32>
    %c0_21 = arith.constant 0 : index
    %c0_22 = arith.constant 0 : index
    %50 = vector.load %arg9[%c0_21, %c0_22] : memref<64x1xf32, #tpu.memory_space<vmem>>, vector<64x1xf32>
    tpu.vector_store %arg9[%c0_21, %c0_22], %49 {strides = array<i32>} : memref<64x1xf32, #tpu.memory_space<vmem>>, vector<64x1xf32>,
    %c0_23 = arith.constant 0 : index
    %c0_24 = arith.constant 0 : index
    %51 = vector.load %arg10[%c0_23, %c0_24] : memref<64x1xf32, #tpu.memory_space<vmem>>, vector<64x1xf32>
    %cst_25 = arith.constant dense<0.000000e+00> : vector<64xf32>
    %52 = vector.multi_reduction <add>, %25, %cst_25 [1] : vector<64x128xf32> to vector<64xf32>
    %53 = vector.shape_cast %52 : vector<64xf32> to vector<64x1xf32>
    %54 = arith.addf %51, %53 : vector<64x1xf32>
    %c0_26 = arith.constant 0 : index
    %c0_27 = arith.constant 0 : index
    %55 = vector.load %arg10[%c0_26, %c0_27] : memref<64x1xf32, #tpu.memory_space<vmem>>, vector<64x1xf32>
    tpu.vector_store %arg10[%c0_26, %c0_27], %54 {strides = array<i32>} : memref<64x1xf32, #tpu.memory_space<vmem>>, vector<64x1xf32>,
    %c0_i32_28 = arith.constant 0 : i32
    %56 = arith.cmpi eq, %arg1, %c0_i32_28 : i32
    %57 = arith.extui %56 : i1 to i32
    %c0_i32_29 = arith.constant 0 : i32
    %58 = arith.cmpi ne, %57, %c0_i32_29 : i32
    scf.if %58 {
      %c0_30 = arith.constant 0 : index
      %c0_31 = arith.constant 0 : index
      %59 = vector.load %arg7[%c0_30, %c0_31] : memref<64x1xf32, #tpu.memory_space<vmem>>, vector<64x1xf32>
      %c0_32 = arith.constant 0 : index
      %c0_33 = arith.constant 0 : index
      %60 = vector.load %arg8[%c0_32, %c0_33] : memref<64x1xf32, #tpu.memory_space<vmem>>, vector<64x1xf32>
      %61 = math.log %60 : vector<64x1xf32>
      %62 = arith.addf %59, %61 : vector<64x1xf32>
      %c0_34 = arith.constant 0 : index
      %c0_35 = arith.constant 0 : index
      %63 = vector.load %arg10[%c0_34, %c0_35] : memref<64x1xf32, #tpu.memory_space<vmem>>, vector<64x1xf32>
      %c0_36 = arith.constant 0 : index
      %c0_37 = arith.constant 0 : index
      %64 = vector.load %arg9[%c0_36, %c0_37] : memref<64x1xf32, #tpu.memory_space<vmem>>, vector<64x1xf32>
      %65 = arith.mulf %63, %62 : vector<64x1xf32>
      %66 = arith.subf %64, %65 : vector<64x1xf32>
      %cst_38 = arith.constant 1.000000e+00 : f32
      %67 = vector.broadcast %cst_38 : f32 to vector<64x1xf32>
      %68 = arith.maximumf %63, %67 : vector<64x1xf32>
      %69 = arith.divf %66, %68 : vector<64x1xf32>
      %c64_i32_39 = arith.constant 64 : i32
      %70 = arith.muli %arg0, %c64_i32_39 : i32
      %71 = tpu.iota {dimensions = array<i32: 0>} : vector<64x1xi32>
      %72 = vector.broadcast %70 : i32 to vector<64x1xi32>
      %73 = arith.addi %72, %71 : vector<64x1xi32>
      %c8_i32_40 = arith.constant 8 : i32
      %74 = vector.broadcast %c8_i32_40 : i32 to vector<64x1xi32>
      %75 = arith.cmpi slt, %73, %74 : vector<64x1xi32>
      %cst_41 = arith.constant 0.000000e+00 : f32
      %76 = vector.broadcast %cst_41 : f32 to vector<64x1xf32>
      %77 = arith.select %75, %69, %76 : vector<64x1xi1>, vector<64x1xf32>
      %78 = vector.shape_cast %77 : vector<64x1xf32> to vector<1x64x1xf32>
      %cst_42 = arith.constant dense<0.000000e+00> : vector<1xf32>
      %79 = vector.multi_reduction <add>, %78, %cst_42 [1, 2] : vector<1x64x1xf32> to vector<1xf32>
      %80 = vector.shape_cast %79 : vector<1xf32> to vector<1x1x1xf32>
      %81 = vector.extract %80[0, 0, 0] : f32 from vector<1x1x1xf32>
      %82 = vector.broadcast %81 : f32 to vector<1x1x1xf32>
      %83 = vector.shape_cast %82 : vector<1x1x1xf32> to vector<1x1x1xf32>
      %84 = vector.broadcast %83 : vector<1x1x1xf32> to vector<1x8x128xf32>
      %c0_43 = arith.constant 0 : index
      %c0_44 = arith.constant 0 : index
      %c0_45 = arith.constant 0 : index
      %85 = vector.load %arg6[%c0_43, %c0_44, %c0_45] : memref<1x8x128xf32, #tpu.memory_space<vmem>>, vector<1x8x128xf32>
      tpu.vector_store %arg6[%c0_43, %c0_44, %c0_45], %84 {strides = array<i32>} : memref<1x8x128xf32, #tpu.memory_space<vmem>>, vector<1x8x128xf32>,
    } else {
    }
    return
  }
  func.func @transform_0(%arg0: i32, %arg1: i32) -> (i32, i32) {
    %c0_i32 = arith.constant 0 : i32
    %c0_i32_0 = arith.constant 0 : i32
    return %arg0, %c0_i32 : i32, i32
  }
  func.func @transform_1(%arg0: i32, %arg1: i32) -> (i32, i32) {
    %c0_i32 = arith.constant 0 : i32
    %c0_i32_0 = arith.constant 0 : i32
    return %arg1, %c0_i32 : i32, i32
  }
  func.func @transform_2(%arg0: i32, %arg1: i32) -> (i32, i32) {
    %c0_i32 = arith.constant 0 : i32
    %c0_i32_0 = arith.constant 0 : i32
    return %arg0, %c0_i32 : i32, i32
  }
  func.func @transform_3(%arg0: i32, %arg1: i32) -> (i32, i32) {
    %c0_i32 = arith.constant 0 : i32
    %c0_i32_0 = arith.constant 0 : i32
    return %c0_i32, %arg1 : i32, i32
  }
  func.func @transform_4(%arg0: i32, %arg1: i32) -> (i32, i32, i32) {
    %c0_i32 = arith.constant 0 : i32
    %c0_i32_0 = arith.constant 0 : i32
    %c0_i32_1 = arith.constant 0 : i32
    return %arg0, %c0_i32, %c0_i32_0 : i32, i32, i32
  }
}

</mosaic_0001>

<llo_original>
// kernel: tpu_custom_call.1
$region0: #{tpu_custom_call.1}
  #allocation0 [shape = 'u32[]', space=smem, size = 0x4, offset = 0x4, fixed_abs, tag = 'smem constant byte address 0x4 - core index']
  #allocation1 [shape = 'u32[144,128]{1,0:T(1,128)}', space=vmem, size = 0x12000, scoped, tag = 'internal scratch']
  #allocation2 [shape = 'f32[64,1]{1,0:T(8,128)}', space=vmem, size = 0x8000, scoped, tag = 'scratch operand']
  #allocation3 [shape = 'f32[64,1]{1,0:T(8,128)}', space=vmem, size = 0x8000, scoped, tag = 'scratch operand']
  #allocation4 [shape = 'f32[64,1]{1,0:T(8,128)}', space=vmem, size = 0x8000, scoped, tag = 'scratch operand']
  #allocation5 [shape = 'f32[64,1]{1,0:T(8,128)}', space=vmem, size = 0x8000, scoped, tag = 'scratch operand']
  %s0 = inlined_call_operand.hbm [shape: bf16[128,512], index: 0, kind: input, shape index: {}]
  %s1 = inlined_call_operand.hbm [shape: bf16[128,512], index: 1, kind: input, shape index: {}]
  %s2 = inlined_call_operand.vmem [shape: s32[128,1], index: 2, kind: input, shape index: {}]
  %s3 = inlined_call_operand.vmem [shape: s32[1,128], index: 3, kind: input, shape index: {}]
  %s4 = inlined_call_operand.hbm [shape: f32[2,8,128], index: 4, kind: output, shape index: {}]
  %s5 = sld [smem:[#allocation0]]
  $region65: #{tpu_custom_call.1} parent=0
    _
  %s7 = ssub.s32 1, %s5
  %s8 = scalar_select 0, %s7, %s5
  $region1: #{tpu_custom_call.1} parent=0
    #allocation6 [shape = 'u8[131072]{0}', space=vmem, size = 0x20000, scoped, tag = 'input window, operand 0']
    #allocation7 [shape = 's32[2]{0}', space=sflag, size = 0x8, scoped, tag = 'scoped memory for tpu_custom_call.1']
    #allocation8 [shape = 's32[2]{0}', space=sflag, size = 0x8, scoped, tag = 'scoped memory for tpu_custom_call.1']
    #allocation9 [shape = 'u8[131072]{0}', space=vmem, size = 0x20000, scoped, tag = 'input window, operand 1, single buffered']
    #allocation10 [shape = 's32[1]{0}', space=sflag, size = 0x4, scoped, tag = 'scoped memory for tpu_custom_call.1']
    #allocation11 [shape = 'u8[8192]{0}', space=vmem, size = 0x2000, scoped, tag = 'output window, operand 0']
    %9 = vsyncpa [#allocation7], 0
    %s10 = scalar_lea.sflag [#allocation7], 1
    %11 = vsyncpa %s10, 0
    %12 = vsyncpa [#allocation10], 0
    %13 = vsyncpa [#allocation8], 0
    %s14 = scalar_lea.sflag [#allocation8], 1
    %15 = vsyncpa %s14, 0
    loop: start=0, step=1, limit=4
    $region2: #{tpu_custom_call.1} parent=1 // loop_pre_header
      _
    $region3: #{tpu_custom_call.1} parent=1 // loop_header
      %s17 = sphi 0, %s21
      %p18 = scmp.ge.s32.totalorder %s17, 4
      %s24 = sphi 0, %s36
      %s25 = sphi 0, %s32
      %s26 = sphi 0, %s24
      %s27 = sphi 0, %s25
      %s28 = sphi 0, %s26
      %s29 = sphi 0, %s27
      %s39 = sphi 0, %s41
      %s42 = sphi 0, %s39
      %s43 = sphi 0, %s42
      %s59 = sphi 0, %s43
      %s65 = sphi 0, %s67
      %s68 = sphi 0, %s65
      %s69 = sphi 0, %s68
      %s85 = sphi 0, %s69
      %s91 = sphi 0, %s93
      %s94 = sphi 0, %s91
      %s95 = sphi 0, %s94
      %s111 = sphi 0, %s95
      %s117 = sphi 0, %s119
      %s120 = sphi 0, %s117
      %s121 = sphi 0, %s120
      %s137 = sphi 0, %s121
      %s143 = sphi 0, %s145
      %s146 = sphi 0, %s143
      %s147 = sphi 0, %s146
      %s163 = sphi 0, %s147
    $region4: #{tpu_custom_call.1} parent=1 // loop_header_branch
      %20 = sbr.rel (%p18) target = $region8
    $region5: #{tpu_custom_call.1} parent=1 // loop_body
      %s22 = ssub.s32 %s17, 1
      %s23 = ssub.s32 %s17, 2
      %s30 = sadd.s32 1, %s25
      %p31 = scmp.ge.s32.totalorder %s30, 1
      %s32 = scalar_select %p31, 0, %s30
      %s33 = sadd.s32 1, %s24
      %s34 = scalar_select %p31, %s33, %s24
      %p35 = scmp.ge.s32.totalorder %s34, 2
      %s36 = scalar_select %p35, 0, %s34
      %s37 = ssub.s32 %s24, %s36
      %p38 = scmp.eq.s32.totalorder %s37, 0
      %s40 = sadd.s32 %s39, 1
      %s41 = scalar_select %p38, %s39, %s40
      %p44 = pneg %p38
      %p45 = scmp.eq.s32.totalorder %s17, 1
      %p46 = por %p44, %p45
      %p47 = scmp.ne.s32.totalorder %s39, %s42
      %p48 = scmp.eq.s32.totalorder %s17, 0
      %p49 = por %p47, %p48
      %p50 = scmp.ne.s32.totalorder %s39, %s42
      %p51 = scmp.eq.s32.totalorder %s22, 1
      %p52 = por %p50, %p51
      %p53 = scmp.ne.s32.totalorder %s42, %s43
      %p54 = scmp.eq.s32.totalorder %s22, 0
      %p55 = por %p53, %p54
      %p56 = scmp.ne.s32.totalorder %s42, %s43
      %p57 = scmp.eq.s32.totalorder %s23, 1
      %p58 = por %p56, %p57
      %p60 = scmp.ne.s32.totalorder %s43, %s59
      %p61 = scmp.eq.s32.totalorder %s23, 0
      %p62 = por %p60, %p61
      %s63 = ssub.s32 %s25, %s32
      %p64 = scmp.eq.s32.totalorder %s63, 0
      %s66 = sadd.s32 %s65, 1
      %s67 = scalar_select %p64, %s65, %s66
      %p70 = pneg %p64
      %p71 = scmp.eq.s32.totalorder %s17, 1
      %p72 = por %p70, %p71
      %p73 = scmp.ne.s32.totalorder %s65, %s68
      %p74 = scmp.eq.s32.totalorder %s17, 0
      %p75 = por %p73, %p74
      %p76 = scmp.ne.s32.totalorder %s65, %s68
      %p77 = scmp.eq.s32.totalorder %s22, 1
      %p78 = por %p76, %p77
      %p79 = scmp.ne.s32.totalorder %s68, %s69
      %p80 = scmp.eq.s32.totalorder %s22, 0
      %p81 = por %p79, %p80
      %p82 = scmp.ne.s32.totalorder %s68, %s69
      %p83 = scmp.eq.s32.totalorder %s23, 1
      %p84 = por %p82, %p83
      %p86 = scmp.ne.s32.totalorder %s69, %s85
      %p87 = scmp.eq.s32.totalorder %s23, 0
      %p88 = por %p86, %p87
      %s89 = ssub.s32 %s24, %s36
      %p90 = scmp.eq.s32.totalorder %s89, 0
      %s92 = sadd.s32 %s91, 1
      %s93 = scalar_select %p90, %s91, %s92
      %p96 = pneg %p90
      %p97 = scmp.eq.s32.totalorder %s17, 1
      %p98 = por %p96, %p97
      %p99 = scmp.ne.s32.totalorder %s91, %s94
      %p100 = scmp.eq.s32.totalorder %s17, 0
      %p101 = por %p99, %p100
      %p102 = scmp.ne.s32.totalorder %s91, %s94
      %p103 = scmp.eq.s32.totalorder %s22, 1
      %p104 = por %p102, %p103
      %p105 = scmp.ne.s32.totalorder %s94, %s95
      %p106 = scmp.eq.s32.totalorder %s22, 0
      %p107 = por %p105, %p106
      %p108 = scmp.ne.s32.totalorder %s94, %s95
      %p109 = scmp.eq.s32.totalorder %s23, 1
      %p110 = por %p108, %p109
      %p112 = scmp.ne.s32.totalorder %s95, %s111
      %p113 = scmp.eq.s32.totalorder %s23, 0
      %p114 = por %p112, %p113
      %s115 = ssub.s32 %s25, %s32
      %p116 = scmp.eq.s32.totalorder %s115, 0
      %s118 = sadd.s32 %s117, 1
      %s119 = scalar_select %p116, %s117, %s118
      %p122 = pneg %p116
      %p123 = scmp.eq.s32.totalorder %s17, 1
      %p124 = por %p122, %p123
      %p125 = scmp.ne.s32.totalorder %s117, %s120
      %p126 = scmp.eq.s32.totalorder %s17, 0
      %p127 = por %p125, %p126
      %p128 = scmp.ne.s32.totalorder %s117, %s120
      %p129 = scmp.eq.s32.totalorder %s22, 1
      %p130 = por %p128, %p129
      %p131 = scmp.ne.s32.totalorder %s120, %s121
      %p132 = scmp.eq.s32.totalorder %s22, 0
      %p133 = por %p131, %p132
      %p134 = scmp.ne.s32.totalorder %s120, %s121
      %p135 = scmp.eq.s32.totalorder %s23, 1
      %p136 = por %p134, %p135
      %p138 = scmp.ne.s32.totalorder %s121, %s137
      %p139 = scmp.eq.s32.totalorder %s23, 0
      %p140 = por %p138, %p139
      %s141 = ssub.s32 %s24, %s36
      %p142 = scmp.eq.s32.totalorder %s141, 0
      %s144 = sadd.s32 %s143, 1
      %s145 = scalar_select %p142, %s143, %s144
      %p148 = pneg %p142
      %p149 = scmp.eq.s32.totalorder %s17, 1
      %p150 = por %p148, %p149
      %p151 = scmp.ne.s32.totalorder %s143, %s146
      %p152 = scmp.eq.s32.totalorder %s17, 0
      %p153 = por %p151, %p152
      %p154 = scmp.ne.s32.totalorder %s143, %s146
      %p155 = scmp.eq.s32.totalorder %s22, 1
      %p156 = por %p154, %p155
      %p157 = scmp.ne.s32.totalorder %s146, %s147
      %p158 = scmp.eq.s32.totalorder %s22, 0
      %p159 = por %p157, %p158
      %p160 = scmp.ne.s32.totalorder %s146, %s147
      %p161 = scmp.eq.s32.totalorder %s23, 1
      %p162 = por %p160, %p161
      %p164 = scmp.ne.s32.totalorder %s147, %s163
      %p165 = scmp.eq.s32.totalorder %s23, 0
      %p166 = por %p164, %p165
      %p167 = scmp.le.s32.totalorder 1, %s17
      %p168 = scmp.lt.s32.totalorder %s17, 3
      %p169 = pnand %p167, %p168
      %p170 = pneg %p169
      // Predicated region
      $region9: #{tpu_custom_call.1} parent=5 // pred_check
        _
      $region10: #{tpu_custom_call.1} parent=5 // pred_check_branch
        %172 = sbr.rel (%p169) target = $region12
      $region11: #{tpu_custom_call.1} parent=5 // pred_region
        %s173 = ssub.s32 %s17, 1
        // Predicated region
        $region13: #{tpu_custom_call.1} parent=11 // pred_check
          %p174 = pneg %p81
        $region14: #{tpu_custom_call.1} parent=11 // pred_check_branch
          %176 = sbr.rel (%p174) target = $region16
        $region15: #{tpu_custom_call.1} parent=11 // pred_region
          %s177 = smul.u32 16, %s27
          %s179 = ssub.s32 4096, 4096
          %180 = vsyncadd [#allocation10], %s179
          %s181 = smul.addr %s177, 4
          %s182 = smul.addr %s181, 64
          %s183 = scalar_lea.hbm %s1, %s182
          %s184 = sshll.u32 [#allocation9], 4
          %s185 = int_to_ptr.vmem [resolvable:$true] %s184
          %190 = dma.hbm_to_vmem [thread:$0]  %s183, 4096, %s185, [#allocation10], 256, 256, 16
        $region16: #{tpu_custom_call.1} parent=11 // pred_fallthru
          _
        // Predicated region
        $region17: #{tpu_custom_call.1} parent=11 // pred_check
          %p191 = pneg %p133
        $region18: #{tpu_custom_call.1} parent=11 // pred_check_branch
          %193 = sbr.rel (%p191) target = $region20
        $region19: #{tpu_custom_call.1} parent=11 // pred_region
          %p194 = scmp.lt.s32.totalorder %s27, 0
          %s195 = scalar_select %p194, %s27, 0
          %s196 = scalar_lea.vmem %s3, %s195
        $region20: #{tpu_custom_call.1} parent=11 // pred_fallthru
          _
      $region12: #{tpu_custom_call.1} parent=5 // pred_fallthru
        _
      %p197 = scmp.lt.s32.totalorder %s17, 2
      // Predicated region
      $region21: #{tpu_custom_call.1} parent=5 // pred_check
        %p198 = pneg %p197
      $region22: #{tpu_custom_call.1} parent=5 // pred_check_branch
        %200 = sbr.rel (%p198) target = $region24
      $region23: #{tpu_custom_call.1} parent=5 // pred_region
        // Predicated region
        $region25: #{tpu_custom_call.1} parent=23 // pred_check
          %p201 = pneg %p49
        $region26: #{tpu_custom_call.1} parent=23 // pred_check_branch
          %203 = sbr.rel (%p201) target = $region28
        $region27: #{tpu_custom_call.1} parent=23 // pred_region
          %s204 = sand.u32 %s39, 1
          %s205 = scalar_lea.sflag [#allocation7], %s204
          %s206 = sand.u32 %s39, 1
          %s207 = smul.addr %s206, 128
          %s208 = scalar_lea.vmem [#allocation6], %s207
          %s209 = smul.u32 8, %s24
          %s211 = ssub.s32 2048, 2048
          %212 = vsyncadd %s205, %s211
          %s213 = smul.addr %s209, 4
          %s214 = smul.addr %s213, 64
          %s215 = scalar_lea.hbm %s0, %s214
          %s216 = sshll.u32 %s208, 4
          %s217 = int_to_ptr.vmem [resolvable:$true] %s216
          %222 = dma.hbm_to_vmem [thread:$0]  %s215, 2048, %s217, %s205, 256, 256, 16
        $region28: #{tpu_custom_call.1} parent=23 // pred_fallthru
          _
        // Predicated region
        $region29: #{tpu_custom_call.1} parent=23 // pred_check
          %p223 = pneg %p101
        $region30: #{tpu_custom_call.1} parent=23 // pred_check_branch
          %225 = sbr.rel (%p223) target = $region32
        $region31: #{tpu_custom_call.1} parent=23 // pred_region
          %s226 = smul.u32 8, %s24
          %p227 = scmp.lt.s32.totalorder %s226, 15
          %s228 = scalar_select %p227, %s226, 15
          %s229 = smul.addr %s228, 8
          %s230 = scalar_lea.vmem %s2, %s229
          %s231 = smul.u32 8, %s24
        $region32: #{tpu_custom_call.1} parent=23 // pred_fallthru
          _
      $region24: #{tpu_custom_call.1} parent=5 // pred_fallthru
        _
      %p232 = scmp.le.s32.totalorder 1, %s17
      %p233 = scmp.lt.s32.totalorder %s17, 3
      %p234 = pnand %p232, %p233
      %p235 = pneg %p234
      // Predicated region
      $region33: #{tpu_custom_call.1} parent=5 // pred_check
        _
      $region34: #{tpu_custom_call.1} parent=5 // pred_check_branch
        %237 = sbr.rel (%p234) target = $region36
      $region35: #{tpu_custom_call.1} parent=5 // pred_region
        %s238 = ssub.s32 %s17, 1
        %s239 = sand.u32 %s42, 1
        %s240 = scalar_lea.sflag [#allocation7], %s239
        %s241 = sand.u32 %s42, 1
        %s242 = smul.addr %s241, 128
        %s243 = scalar_lea.vmem [#allocation6], %s242
        // Predicated region
        $region37: #{tpu_custom_call.1} parent=35 // pred_check
          %p244 = pneg %p55
        $region38: #{tpu_custom_call.1} parent=35 // pred_check_branch
          %246 = sbr.rel (%p244) target = $region40
        $region39: #{tpu_custom_call.1} parent=35 // pred_region
          %247 = dma.done %s240, 2048
        $region40: #{tpu_custom_call.1} parent=35 // pred_fallthru
          _
        // Predicated region
        $region41: #{tpu_custom_call.1} parent=35 // pred_check
          %p248 = pneg %p81
        $region42: #{tpu_custom_call.1} parent=35 // pred_check_branch
          %250 = sbr.rel (%p248) target = $region44
        $region43: #{tpu_custom_call.1} parent=35 // pred_region
          %251 = dma.done [#allocation10], 4096
        $region44: #{tpu_custom_call.1} parent=35 // pred_fallthru
          _
        %s252 = sand.u32 %s42, 1
        %s253 = scalar_lea.sflag [#allocation7], %s252
        %s254 = sand.u32 %s42, 1
        %s255 = smul.addr %s254, 128
        %s256 = scalar_lea.vmem [#allocation6], %s255
        %p257 = pneg %p55
        %p258 = pneg %p52
        %p259 = pneg %p81
        %p260 = pneg %p78
        %s261 = smul.u32 8, %s26
        %p262 = scmp.lt.s32.totalorder %s261, 15
        %s263 = scalar_select %p262, %s261, 15
        %s264 = smul.addr %s263, 8
        %s265 = scalar_lea.vmem %s2, %s264
        %p266 = pneg %p107
        %p267 = pneg %p104
        %p268 = scmp.lt.s32.totalorder %s27, 0
        %s269 = scalar_select %p268, %s27, 0
        %s270 = scalar_lea.vmem %s3, %s269
        %p271 = pneg %p133
        %p272 = pneg %p130
        %p273 = pneg %p159
        %p274 = pneg %p156
        %s275 = sand.u32 %s146, 1
        %s276 = scalar_lea.sflag [#allocation8], %s275
        %s277 = sand.u32 %s146, 1
        %s278 = smul.addr %s277, 8
        %s279 = scalar_lea.vmem [#allocation11], %s278
        %s280 = smul.u32 8, %s26
        %s281 = smul.u32 16, %s27
        %s282 = smul.u32 8, %s26
        %p283 = scmp.lt.s32.totalorder %s282, 15
        %s284 = scalar_select %p283, %s282, 15
        %s285 = smul.addr %s284, 8
        %s286 = scalar_lea.vmem %s2, %s285
        %s287 = smul.u32 8, %s26
        %p288 = scmp.lt.s32.totalorder %s27, 0
        %s289 = scalar_select %p288, %s27, 0
        %s290 = scalar_lea.vmem %s3, %s289
        %p292 = scmp.eq.s32.totalorder %s27, 0
        // Predicated region
        $region45: #{tpu_custom_call.1} parent=35 // pred_check
          %p293 = pneg %p292
        $region46: #{tpu_custom_call.1} parent=35 // pred_check_branch
          %295 = sbr.rel (%p293) target = $region48
        $region47: #{tpu_custom_call.1} parent=35 // pred_region
          %vm296 = vcmask 7168
          %297 = vst.msk [vmem:[#allocation2] sm:$0xff] %vm296, -inf
          %298 = vst.msk [vmem:[#allocation2 + $0x8] sm:$0xff] %vm296, -inf
          %299 = vst.msk [vmem:[#allocation2 + $0x10] sm:$0xff] %vm296, -inf
          %300 = vst.msk [vmem:[#allocation2 + $0x18] sm:$0xff] %vm296, -inf
          %301 = vst.msk [vmem:[#allocation2 + $0x20] sm:$0xff] %vm296, -inf
          %302 = vst.msk [vmem:[#allocation2 + $0x28] sm:$0xff] %vm296, -inf
          %303 = vst.msk [vmem:[#allocation2 + $0x30] sm:$0xff] %vm296, -inf
          %304 = vst.msk [vmem:[#allocation2 + $0x38] sm:$0xff] %vm296, -inf
          %305 = vst.msk [vmem:[#allocation3] sm:$0xff] %vm296, 0.0
          %306 = vst.msk [vmem:[#allocation3 + $0x8] sm:$0xff] %vm296, 0.0
          %307 = vst.msk [vmem:[#allocation3 + $0x10] sm:$0xff] %vm296, 0.0
          %308 = vst.msk [vmem:[#allocation3 + $0x18] sm:$0xff] %vm296, 0.0
          %309 = vst.msk [vmem:[#allocation3 + $0x20] sm:$0xff] %vm296, 0.0
          %310 = vst.msk [vmem:[#allocation3 + $0x28] sm:$0xff] %vm296, 0.0
          %311 = vst.msk [vmem:[#allocation3 + $0x30] sm:$0xff] %vm296, 0.0
          %312 = vst.msk [vmem:[#allocation3 + $0x38] sm:$0xff] %vm296, 0.0
          %313 = vst.msk [vmem:[#allocation4] sm:$0xff] %vm296, 0.0
          %314 = vst.msk [vmem:[#allocation4 + $0x8] sm:$0xff] %vm296, 0.0
          %315 = vst.msk [vmem:[#allocation4 + $0x10] sm:$0xff] %vm296, 0.0
          %316 = vst.msk [vmem:[#allocation4 + $0x18] sm:$0xff] %vm296, 0.0
          %317 = vst.msk [vmem:[#allocation4 + $0x20] sm:$0xff] %vm296, 0.0
          %318 = vst.msk [vmem:[#allocation4 + $0x28] sm:$0xff] %vm296, 0.0
          %319 = vst.msk [vmem:[#allocation4 + $0x30] sm:$0xff] %vm296, 0.0
          %320 = vst.msk [vmem:[#allocation4 + $0x38] sm:$0xff] %vm296, 0.0
          %321 = vst.msk [vmem:[#allocation5] sm:$0xff] %vm296, 0.0
          %322 = vst.msk [vmem:[#allocation5 + $0x8] sm:$0xff] %vm296, 0.0
          %323 = vst.msk [vmem:[#allocation5 + $0x10] sm:$0xff] %vm296, 0.0
          %324 = vst.msk [vmem:[#allocation5 + $0x18] sm:$0xff] %vm296, 0.0
          %325 = vst.msk [vmem:[#allocation5 + $0x20] sm:$0xff] %vm296, 0.0
          %326 = vst.msk [vmem:[#allocation5 + $0x28] sm:$0xff] %vm296, 0.0
          %327 = vst.msk [vmem:[#allocation5 + $0x30] sm:$0xff] %vm296, 0.0
          %328 = vst.msk [vmem:[#allocation5 + $0x38] sm:$0xff] %vm296, 0.0
        $region48: #{tpu_custom_call.1} parent=35 // pred_fallthru
          _
        %v329 = vld [vmem:[%s243] sm:$0xff]
        %v330 = vld [vmem:[%s243 + $0x8] sm:$0xff]
        %v331 = vld [vmem:[%s243 + $0x10] sm:$0xff]
        %v332 = vld [vmem:[%s243 + $0x18] sm:$0xff]
        %v333 = vld [vmem:[%s243 + $0x20] sm:$0xff]
        %v334 = vld [vmem:[%s243 + $0x28] sm:$0xff]
        %v335 = vld [vmem:[%s243 + $0x30] sm:$0xff]
        %v336 = vld [vmem:[%s243 + $0x38] sm:$0xff]
        %v337 = vld [vmem:[%s243 + $0x40] sm:$0xff]
        %v338 = vld [vmem:[%s243 + $0x48] sm:$0xff]
        %v339 = vld [vmem:[%s243 + $0x50] sm:$0xff]
        %v340 = vld [vmem:[%s243 + $0x58] sm:$0xff]
        %v341 = vld [vmem:[%s243 + $0x60] sm:$0xff]
        %v342 = vld [vmem:[%s243 + $0x68] sm:$0xff]
        %v343 = vld [vmem:[%s243 + $0x70] sm:$0xff]
        %v344 = vld [vmem:[%s243 + $0x78] sm:$0xff]
        %v345 = vld [vmem:[#allocation9] sm:$0xff]
        %v346 = vld [vmem:[#allocation9 + $0x8] sm:$0xff]
        %v347 = vld [vmem:[#allocation9 + $0x10] sm:$0xff]
        %v348 = vld [vmem:[#allocation9 + $0x18] sm:$0xff]
        %v349 = vld [vmem:[#allocation9 + $0x20] sm:$0xff]
        %v350 = vld [vmem:[#allocation9 + $0x28] sm:$0xff]
        %v351 = vld [vmem:[#allocation9 + $0x30] sm:$0xff]
        %v352 = vld [vmem:[#allocation9 + $0x38] sm:$0xff]
        %v353 = vld [vmem:[#allocation9 + $0x40] sm:$0xff]
        %v354 = vld [vmem:[#allocation9 + $0x48] sm:$0xff]
        %v355 = vld [vmem:[#allocation9 + $0x50] sm:$0xff]
        %v356 = vld [vmem:[#allocation9 + $0x58] sm:$0xff]
        %v357 = vld [vmem:[#allocation9 + $0x60] sm:$0xff]
        %v358 = vld [vmem:[#allocation9 + $0x68] sm:$0xff]
        %v359 = vld [vmem:[#allocation9 + $0x70] sm:$0xff]
        %v360 = vld [vmem:[#allocation9 + $0x78] sm:$0xff]
        %v361 = vld [vmem:[#allocation9 + $0x80] sm:$0xff]
        %v362 = vld [vmem:[#allocation9 + $0x88] sm:$0xff]
        %v363 = vld [vmem:[#allocation9 + $0x90] sm:$0xff]
        %v364 = vld [vmem:[#allocation9 + $0x98] sm:$0xff]
        %v365 = vld [vmem:[#allocation9 + $0xa0] sm:$0xff]
        %v366 = vld [vmem:[#allocation9 + $0xa8] sm:$0xff]
        %v367 = vld [vmem:[#allocation9 + $0xb0] sm:$0xff]
        %v368 = vld [vmem:[#allocation9 + $0xb8] sm:$0xff]
        %v369 = vld [vmem:[#allocation9 + $0xc0] sm:$0xff]
        %v370 = vld [vmem:[#allocation9 + $0xc8] sm:$0xff]
        %v371 = vld [vmem:[#allocation9 + $0xd0] sm:$0xff]
        %v372 = vld [vmem:[#allocation9 + $0xd8] sm:$0xff]
        %v373 = vld [vmem:[#allocation9 + $0xe0] sm:$0xff]
        %v374 = vld [vmem:[#allocation9 + $0xe8] sm:$0xff]
        %v375 = vld [vmem:[#allocation9 + $0xf0] sm:$0xff]
        %v376 = vld [vmem:[#allocation9 + $0xf8] sm:$0xff]
        %v393 = vunpack.c.l.b16 %v329
        %v394 = vunpack.c.h.b16 %v329
        %v395 = vunpack.c.l.b16 %v330
        %v396 = vunpack.c.h.b16 %v330
        %v397 = vunpack.c.l.b16 %v331
        %v398 = vunpack.c.h.b16 %v331
        %v399 = vunpack.c.l.b16 %v332
        %v400 = vunpack.c.h.b16 %v332
        %v401 = vunpack.c.l.b16 %v333
        %v402 = vunpack.c.h.b16 %v333
        %v403 = vunpack.c.l.b16 %v334
        %v404 = vunpack.c.h.b16 %v334
        %v405 = vunpack.c.l.b16 %v335
        %v406 = vunpack.c.h.b16 %v335
        %v407 = vunpack.c.l.b16 %v336
        %v408 = vunpack.c.h.b16 %v336
        %v409 = vunpack.c.l.b16 %v337
        %v410 = vunpack.c.h.b16 %v337
        %v411 = vunpack.c.l.b16 %v338
        %v412 = vunpack.c.h.b16 %v338
        %v413 = vunpack.c.l.b16 %v339
        %v414 = vunpack.c.h.b16 %v339
        %v415 = vunpack.c.l.b16 %v340
        %v416 = vunpack.c.h.b16 %v340
        %v417 = vunpack.c.l.b16 %v341
        %v418 = vunpack.c.h.b16 %v341
        %v419 = vunpack.c.l.b16 %v342
        %v420 = vunpack.c.h.b16 %v342
        %v421 = vunpack.c.l.b16 %v343
        %v422 = vunpack.c.h.b16 %v343
        %v423 = vunpack.c.l.b16 %v344
        %v424 = vunpack.c.h.b16 %v344
        %v425 = vpack.c.b16 %v397, %v393
        %v426 = vpack.c.b16 %v398, %v394
        %v427 = vpack.c.b16 %v399, %v395
        %v428 = vpack.c.b16 %v400, %v396
        %v429 = vpack.c.b16 %v405, %v401
        %v430 = vpack.c.b16 %v406, %v402
        %v431 = vpack.c.b16 %v407, %v403
        %v432 = vpack.c.b16 %v408, %v404
        %v433 = vpack.c.b16 %v413, %v409
        %v434 = vpack.c.b16 %v414, %v410
        %v435 = vpack.c.b16 %v415, %v411
        %v436 = vpack.c.b16 %v416, %v412
        %v437 = vpack.c.b16 %v421, %v417
        %v438 = vpack.c.b16 %v422, %v418
        %v439 = vpack.c.b16 %v423, %v419
        %v440 = vpack.c.b16 %v424, %v420
        %v489 = vunpack.c.l.b16 %v345
        %v490 = vunpack.c.h.b16 %v345
        %v491 = vunpack.c.l.b16 %v346
        %v492 = vunpack.c.h.b16 %v346
        %v493 = vunpack.c.l.b16 %v347
        %v494 = vunpack.c.h.b16 %v347
        %v495 = vunpack.c.l.b16 %v348
        %v496 = vunpack.c.h.b16 %v348
        %v497 = vunpack.c.l.b16 %v349
        %v498 = vunpack.c.h.b16 %v349
        %v499 = vunpack.c.l.b16 %v350
        %v500 = vunpack.c.h.b16 %v350
        %v501 = vunpack.c.l.b16 %v351
        %v502 = vunpack.c.h.b16 %v351
        %v503 = vunpack.c.l.b16 %v352
        %v504 = vunpack.c.h.b16 %v352
        %v505 = vunpack.c.l.b16 %v353
        %v506 = vunpack.c.h.b16 %v353
        %v507 = vunpack.c.l.b16 %v354
        %v508 = vunpack.c.h.b16 %v354
        %v509 = vunpack.c.l.b16 %v355
        %v510 = vunpack.c.h.b16 %v355
        %v511 = vunpack.c.l.b16 %v356
        %v512 = vunpack.c.h.b16 %v356
        %v513 = vunpack.c.l.b16 %v357
        %v514 = vunpack.c.h.b16 %v357
        %v515 = vunpack.c.l.b16 %v358
        %v516 = vunpack.c.h.b16 %v358
        %v517 = vunpack.c.l.b16 %v359
        %v518 = vunpack.c.h.b16 %v359
        %v519 = vunpack.c.l.b16 %v360
        %v520 = vunpack.c.h.b16 %v360
        %v521 = vunpack.c.l.b16 %v361
        %v522 = vunpack.c.h.b16 %v361
        %v523 = vunpack.c.l.b16 %v362
        %v524 = vunpack.c.h.b16 %v362
        %v525 = vunpack.c.l.b16 %v363
        %v526 = vunpack.c.h.b16 %v363
        %v527 = vunpack.c.l.b16 %v364
        %v528 = vunpack.c.h.b16 %v364
        %v529 = vunpack.c.l.b16 %v365
        %v530 = vunpack.c.h.b16 %v365
        %v531 = vunpack.c.l.b16 %v366
        %v532 = vunpack.c.h.b16 %v366
        %v533 = vunpack.c.l.b16 %v367
        %v534 = vunpack.c.h.b16 %v367
        %v535 = vunpack.c.l.b16 %v368
        %v536 = vunpack.c.h.b16 %v368
        %v537 = vunpack.c.l.b16 %v369
        %v538 = vunpack.c.h.b16 %v369
        %v539 = vunpack.c.l.b16 %v370
        %v540 = vunpack.c.h.b16 %v370
        %v541 = vunpack.c.l.b16 %v371
        %v542 = vunpack.c.h.b16 %v371
        %v543 = vunpack.c.l.b16 %v372
        %v544 = vunpack.c.h.b16 %v372
        %v545 = vunpack.c.l.b16 %v373
        %v546 = vunpack.c.h.b16 %v373
        %v547 = vunpack.c.l.b16 %v374
        %v548 = vunpack.c.h.b16 %v374
        %v549 = vunpack.c.l.b16 %v375
        %v550 = vunpack.c.h.b16 %v375
        %v551 = vunpack.c.l.b16 %v376
        %v552 = vunpack.c.h.b16 %v376
        %v553 = vpack.c.b16 %v493, %v489
        %v554 = vpack.c.b16 %v494, %v490
        %v555 = vpack.c.b16 %v495, %v491
        %v556 = vpack.c.b16 %v496, %v492
        %v557 = vpack.c.b16 %v501, %v497
        %v558 = vpack.c.b16 %v502, %v498
        %v559 = vpack.c.b16 %v503, %v499
        %v560 = vpack.c.b16 %v504, %v500
        %v561 = vpack.c.b16 %v509, %v505
        %v562 = vpack.c.b16 %v510, %v506
        %v563 = vpack.c.b16 %v511, %v507
        %v564 = vpack.c.b16 %v512, %v508
        %v565 = vpack.c.b16 %v517, %v513
        %v566 = vpack.c.b16 %v518, %v514
        %v567 = vpack.c.b16 %v519, %v515
        %v568 = vpack.c.b16 %v520, %v516
        %v569 = vpack.c.b16 %v525, %v521
        %v570 = vpack.c.b16 %v526, %v522
        %v571 = vpack.c.b16 %v527, %v523
        %v572 = vpack.c.b16 %v528, %v524
        %v573 = vpack.c.b16 %v533, %v529
        %v574 = vpack.c.b16 %v534, %v530
        %v575 = vpack.c.b16 %v535, %v531
        %v576 = vpack.c.b16 %v536, %v532
        %v577 = vpack.c.b16 %v541, %v537
        %v578 = vpack.c.b16 %v542, %v538
        %v579 = vpack.c.b16 %v543, %v539
        %v580 = vpack.c.b16 %v544, %v540
        %v581 = vpack.c.b16 %v549, %v545
        %v582 = vpack.c.b16 %v550, %v546
        %v583 = vpack.c.b16 %v551, %v547
        %v584 = vpack.c.b16 %v552, %v548
        %617 = vmatprep.subr.bf16.mxu0 %v554
        %618 = vmatpush1.bf16.xpose.msra.mxu0 %v553
        %619 = vmatprep.subr.bf16.mxu0 %v558
        %620 = vmatpush1.bf16.xpose.msra.mxu0 %v557
        %621 = vmatprep.subr.bf16.mxu0 %v562
        %622 = vmatpush1.bf16.xpose.msra.mxu0 %v561
        %623 = vmatprep.subr.bf16.mxu0 %v566
        %624 = vmatpush1.bf16.xpose.msra.mxu0 %v565
        %625 = vmatprep.subr.bf16.mxu0 %v570
        %626 = vmatpush1.bf16.xpose.msra.mxu0 %v569
        %627 = vmatprep.subr.bf16.mxu0 %v574
        %628 = vmatpush1.bf16.xpose.msra.mxu0 %v573
        %629 = vmatprep.subr.bf16.mxu0 %v578
        %630 = vmatpush1.bf16.xpose.msra.mxu0 %v577
        %631 = vmatprep.subr.bf16.mxu0 %v582
        %632 = vmatpush1.bf16.xpose.msra.mxu0 %v581
        %633 = vmatprep.subr.bf16.mxu0 0
        %634 = vmatpush1.bf16.xpose.msra.mxu0 0
        %635 = vmatprep.subr.bf16.mxu0 0
        %636 = vmatpush1.bf16.xpose.msra.mxu0 0
        %637 = vmatprep.subr.bf16.mxu0 0
        %638 = vmatpush1.bf16.xpose.msra.mxu0 0
        %639 = vmatprep.subr.bf16.mxu0 0
        %640 = vmatpush1.bf16.xpose.msra.mxu0 0
        %641 = vmatprep.subr.bf16.mxu0 0
        %642 = vmatpush1.bf16.xpose.msra.mxu0 0
        %643 = vmatprep.subr.bf16.mxu0 0
        %644 = vmatpush1.bf16.xpose.msra.mxu0 0
        %645 = vmatprep.subr.bf16.mxu0 0
        %646 = vmatpush1.bf16.xpose.msra.mxu0 0
        %647 = vmatprep.subr.bf16.mxu0 0
        %648 = vmatpush1.bf16.xpose.msra.mxu0 0
        %649 = vmatprep.mubr.bf16.mxu0 %v426
        %650 = vmatmul.mubr.bf16.gmra.mrb[0].mxu0 %v425
        %v651 = vpop.f32.mrb[0].mxu0
        %v652 = vadd.f32 0.0, %v651
        %v653 = vpop.f32.mrb[0].mxu0
        %v654 = vpop.f32.mrb[0].mxu0
        %v655 = vadd.f32 0.0, %v654
        %v656 = vpop.f32.mrb[0].mxu0
        %657 = vmatprep.mubr.bf16.mxu0 %v430
        %658 = vmatmul.mubr.bf16.gmra.mrb[0].mxu0 %v429
        %v659 = vpop.f32.mrb[0].mxu0
        %v660 = vadd.f32 0.0, %v659
        %v661 = vpop.f32.mrb[0].mxu0
        %v662 = vpop.f32.mrb[0].mxu0
        %v663 = vadd.f32 0.0, %v662
        %v664 = vpop.f32.mrb[0].mxu0
        %665 = vmatprep.mubr.bf16.mxu0 %v434
        %666 = vmatmul.mubr.bf16.gmra.mrb[0].mxu0 %v433
        %v667 = vpop.f32.mrb[0].mxu0
        %v668 = vadd.f32 0.0, %v667
        %v669 = vpop.f32.mrb[0].mxu0
        %v670 = vpop.f32.mrb[0].mxu0
        %v671 = vadd.f32 0.0, %v670
        %v672 = vpop.f32.mrb[0].mxu0
        %673 = vmatprep.mubr.bf16.mxu0 %v438
        %674 = vmatmul.mubr.bf16.gmra.mrb[0].mxu0 %v437
        %v675 = vpop.f32.mrb[0].mxu0
        %v676 = vadd.f32 0.0, %v675
        %v677 = vpop.f32.mrb[0].mxu0
        %v678 = vpop.f32.mrb[0].mxu0
        %v679 = vadd.f32 0.0, %v678
        %v680 = vpop.f32.mrb[0].mxu0
        %681 = vdwg.mxu0
        %682 = vmatprep.subr.bf16.mxu0 %v556
        %683 = vmatpush1.bf16.xpose.msra.mxu0 %v555
        %684 = vmatprep.subr.bf16.mxu0 %v560
        %685 = vmatpush1.bf16.xpose.msra.mxu0 %v559
        %686 = vmatprep.subr.bf16.mxu0 %v564
        %687 = vmatpush1.bf16.xpose.msra.mxu0 %v563
        %688 = vmatprep.subr.bf16.mxu0 %v568
        %689 = vmatpush1.bf16.xpose.msra.mxu0 %v567
        %690 = vmatprep.subr.bf16.mxu0 %v572
        %691 = vmatpush1.bf16.xpose.msra.mxu0 %v571
        %692 = vmatprep.subr.bf16.mxu0 %v576
        %693 = vmatpush1.bf16.xpose.msra.mxu0 %v575
        %694 = vmatprep.subr.bf16.mxu0 %v580
        %695 = vmatpush1.bf16.xpose.msra.mxu0 %v579
        %696 = vmatprep.subr.bf16.mxu0 %v584
        %697 = vmatpush1.bf16.xpose.msra.mxu0 %v583
        %698 = vmatprep.subr.bf16.mxu0 0
        %699 = vmatpush1.bf16.xpose.msra.mxu0 0
        %700 = vmatprep.subr.bf16.mxu0 0
        %701 = vmatpush1.bf16.xpose.msra.mxu0 0
        %702 = vmatprep.subr.bf16.mxu0 0
        %703 = vmatpush1.bf16.xpose.msra.mxu0 0
        %704 = vmatprep.subr.bf16.mxu0 0
        %705 = vmatpush1.bf16.xpose.msra.mxu0 0
        %706 = vmatprep.subr.bf16.mxu0 0
        %707 = vmatpush1.bf16.xpose.msra.mxu0 0
        %708 = vmatprep.subr.bf16.mxu0 0
        %709 = vmatpush1.bf16.xpose.msra.mxu0 0
        %710 = vmatprep.subr.bf16.mxu0 0
        %711 = vmatpush1.bf16.xpose.msra.mxu0 0
        %712 = vmatprep.subr.bf16.mxu0 0
        %713 = vmatpush1.bf16.xpose.msra.mxu0 0
        %714 = vmatprep.mubr.bf16.mxu0 %v428
        %715 = vmatmul.mubr.bf16.gmra.mrb[0].mxu0 %v427
        %v716 = vpop.f32.mrb[0].mxu0
        %v717 = vadd.f32 %v652, %v716
        %v718 = vpop.f32.mrb[0].mxu0
        %v719 = vpop.f32.mrb[0].mxu0
        %v720 = vadd.f32 %v655, %v719
        %v721 = vpop.f32.mrb[0].mxu0
        %722 = vmatprep.mubr.bf16.mxu0 %v432
        %723 = vmatmul.mubr.bf16.gmra.mrb[0].mxu0 %v431
        %v724 = vpop.f32.mrb[0].mxu0
        %v725 = vadd.f32 %v660, %v724
        %v726 = vpop.f32.mrb[0].mxu0
        %v727 = vpop.f32.mrb[0].mxu0
        %v728 = vadd.f32 %v663, %v727
        %v729 = vpop.f32.mrb[0].mxu0
        %730 = vmatprep.mubr.bf16.mxu0 %v436
        %731 = vmatmul.mubr.bf16.gmra.mrb[0].mxu0 %v435
        %v732 = vpop.f32.mrb[0].mxu0
        %v733 = vadd.f32 %v668, %v732
        %v734 = vpop.f32.mrb[0].mxu0
        %v735 = vpop.f32.mrb[0].mxu0
        %v736 = vadd.f32 %v671, %v735
        %v737 = vpop.f32.mrb[0].mxu0
        %738 = vmatprep.mubr.bf16.mxu0 %v440
        %739 = vmatmul.mubr.bf16.gmra.mrb[0].mxu0 %v439
        %v740 = vpop.f32.mrb[0].mxu0
        %v741 = vadd.f32 %v676, %v740
        %v742 = vpop.f32.mrb[0].mxu0
        %v743 = vpop.f32.mrb[0].mxu0
        %v744 = vadd.f32 %v679, %v743
        %v745 = vpop.f32.mrb[0].mxu0
        %746 = vdwg.mxu0
        %s747 = smul.u32 %s26, 64
        %v748 = vlaneseq
        %v749 = vshrl.u32 %v748, 7
        %v750 = vadd.s32 %v749, 8
        %v751 = vadd.s32 %v749, 16
        %v752 = vadd.s32 %v749, 24
        %v753 = vadd.s32 %v749, 32
        %v754 = vadd.s32 %v749, 40
        %v755 = vadd.s32 %v749, 48
        %v756 = vadd.s32 %v749, 56
        %v757 = vstv %s747
        %v758 = vadd.s32 %v757, %v749
        %v759 = vadd.s32 %v757, %v750
        %v760 = vadd.s32 %v757, %v751
        %v761 = vadd.s32 %v757, %v752
        %v762 = vadd.s32 %v757, %v753
        %v763 = vadd.s32 %v757, %v754
        %v764 = vadd.s32 %v757, %v755
        %v765 = vadd.s32 %v757, %v756
        %s766 = smul.u32 %s27, 128
        %v767 = vlaneseq
        %v768 = vand.u32 %v767, 127
        %v769 = vstv %s766
        %v770 = vadd.s32 %v769, %v768
        %vm771 = vcmp.ne.s32.totalorder %v758, %v770
        %vm772 = vcmp.ne.s32.totalorder %v759, %v770
        %vm773 = vcmp.ne.s32.totalorder %v760, %v770
        %vm774 = vcmp.ne.s32.totalorder %v761, %v770
        %vm775 = vcmp.ne.s32.totalorder %v762, %v770
        %vm776 = vcmp.ne.s32.totalorder %v763, %v770
        %vm777 = vcmp.ne.s32.totalorder %v764, %v770
        %vm778 = vcmp.ne.s32.totalorder %v765, %v770
        %vm779 = vcmp.lt.s32.totalorder %v770, 8
        %vm780 = vmand %vm771, %vm779
        %vm781 = vmand %vm772, %vm779
        %vm782 = vmand %vm773, %vm779
        %vm783 = vmand %vm774, %vm779
        %vm784 = vmand %vm775, %vm779
        %vm785 = vmand %vm776, %vm779
        %vm786 = vmand %vm777, %vm779
        %vm787 = vmand %vm778, %vm779
        %v788 = vld [vmem:[%s286] sm:$0xff]
        %v789 = vld [vmem:[%s286 + $0x8] sm:$0xff]
        %v790 = vld [vmem:[%s286 + $0x10] sm:$0xff]
        %v791 = vld [vmem:[%s286 + $0x18] sm:$0xff]
        %v792 = vld [vmem:[%s286 + $0x20] sm:$0xff]
        %v793 = vld [vmem:[%s286 + $0x28] sm:$0xff]
        %v794 = vld [vmem:[%s286 + $0x30] sm:$0xff]
        %v795 = vld [vmem:[%s286 + $0x38] sm:$0xff]
        %v796 = vld [vmem:[%s290] sm:$0x1]
        %797 = vset.pattern.permute.xlu0 0
        %798 = vperm.xlu0 %797, %v788
        %v799 = vpop.permute.xlu0 %798
        %800 = vset.pattern.permute.xlu0 0
        %801 = vperm.xlu0 %800, %v789
        %v802 = vpop.permute.xlu0 %801
        %803 = vset.pattern.permute.xlu0 0
        %804 = vperm.xlu0 %803, %v790
        %v805 = vpop.permute.xlu0 %804
        %806 = vset.pattern.permute.xlu0 0
        %807 = vperm.xlu0 %806, %v791
        %v808 = vpop.permute.xlu0 %807
        %809 = vset.pattern.permute.xlu0 0
        %810 = vperm.xlu0 %809, %v792
        %v811 = vpop.permute.xlu0 %810
        %812 = vset.pattern.permute.xlu0 0
        %813 = vperm.xlu0 %812, %v793
        %v814 = vpop.permute.xlu0 %813
        %815 = vset.pattern.permute.xlu0 0
        %816 = vperm.xlu0 %815, %v794
        %v817 = vpop.permute.xlu0 %816
        %818 = vset.pattern.permute.xlu0 0
        %819 = vperm.xlu0 %818, %v795
        %v820 = vpop.permute.xlu0 %819
        %v821 = vlaneseq
        %v822 = vshrl.u32 %v821, 7
        %v823 = vsub.s32 0, %v822
        %v824 = vrot.slane %v796, %v823
        %vm825 = vcmp.eq.s32.totalorder %v799, %v824
        %vm826 = vcmp.eq.s32.totalorder %v802, %v824
        %vm827 = vcmp.eq.s32.totalorder %v805, %v824
        %vm828 = vcmp.eq.s32.totalorder %v808, %v824
        %vm829 = vcmp.eq.s32.totalorder %v811, %v824
        %vm830 = vcmp.eq.s32.totalorder %v814, %v824
        %vm831 = vcmp.eq.s32.totalorder %v817, %v824
        %vm832 = vcmp.eq.s32.totalorder %v820, %v824
        %vm833 = vmand %vm825, %vm780
        %vm834 = vmand %vm826, %vm781
        %vm835 = vmand %vm827, %vm782
        %vm836 = vmand %vm828, %vm783
        %vm837 = vmand %vm829, %vm784
        %vm838 = vmand %vm830, %vm785
        %vm839 = vmand %vm831, %vm786
        %vm840 = vmand %vm832, %vm787
        %v841 = vsel %vm833, 1, 0
        %v842 = vsel %vm834, 1, 0
        %v843 = vsel %vm835, 1, 0
        %v844 = vsel %vm836, 1, 0
        %v845 = vsel %vm837, 1, 0
        %v846 = vsel %vm838, 1, 0
        %v847 = vsel %vm839, 1, 0
        %v848 = vsel %vm840, 1, 0
        %v849 = vcvt.s32.f32 %v841
        %v850 = vcvt.s32.f32 %v842
        %v851 = vcvt.s32.f32 %v843
        %v852 = vcvt.s32.f32 %v844
        %v853 = vcvt.s32.f32 %v845
        %v854 = vcvt.s32.f32 %v846
        %v855 = vcvt.s32.f32 %v847
        %v856 = vcvt.s32.f32 %v848
        %v857 = vld [vmem:[#allocation2] sm:$0xff]
        %v858 = vld [vmem:[#allocation2 + $0x8] sm:$0xff]
        %v859 = vld [vmem:[#allocation2 + $0x10] sm:$0xff]
        %v860 = vld [vmem:[#allocation2 + $0x18] sm:$0xff]
        %v861 = vld [vmem:[#allocation2 + $0x20] sm:$0xff]
        %v862 = vld [vmem:[#allocation2 + $0x28] sm:$0xff]
        %v863 = vld [vmem:[#allocation2 + $0x30] sm:$0xff]
        %v864 = vld [vmem:[#allocation2 + $0x38] sm:$0xff]
        %865 = vmax.xlane.f32.xlu0 %v717
        %v866 = vpop.xlane.xlu0 %865
        %867 = vmax.xlane.f32.xlu0 %v720
        %v868 = vpop.xlane.xlu0 %867
        %869 = vmax.xlane.f32.xlu0 %v725
        %v870 = vpop.xlane.xlu0 %869
        %871 = vmax.xlane.f32.xlu0 %v728
        %v872 = vpop.xlane.xlu0 %871
        %873 = vmax.xlane.f32.xlu0 %v733
        %v874 = vpop.xlane.xlu0 %873
        %875 = vmax.xlane.f32.xlu0 %v736
        %v876 = vpop.xlane.xlu0 %875
        %877 = vmax.xlane.f32.xlu0 %v741
        %v878 = vpop.xlane.xlu0 %877
        %879 = vmax.xlane.f32.xlu0 %v744
        %v880 = vpop.xlane.xlu0 %879
        %v881 = vmax.f32 %v857, %v866
        %v882 = vmax.f32 %v858, %v868
        %v883 = vmax.f32 %v859, %v870
        %v884 = vmax.f32 %v860, %v872
        %v885 = vmax.f32 %v861, %v874
        %v886 = vmax.f32 %v862, %v876
        %v887 = vmax.f32 %v863, %v878
        %v888 = vmax.f32 %v864, %v880
        %v889 = vsub.f32 %v857, %v881
        %v890 = vsub.f32 %v858, %v882
        %v891 = vsub.f32 %v859, %v883
        %v892 = vsub.f32 %v860, %v884
        %v893 = vsub.f32 %v861, %v885
        %v894 = vsub.f32 %v862, %v886
        %v895 = vsub.f32 %v863, %v887
        %v896 = vsub.f32 %v864, %v888
        %v897 = vmul.f32 %v889, 1.442695
        %v898 = vpow.pop %v897
        %v899 = vmul.f32 %v890, 1.442695
        %v900 = vpow.pop %v899
        %v901 = vmul.f32 %v891, 1.442695
        %v902 = vpow.pop %v901
        %v903 = vmul.f32 %v892, 1.442695
        %v904 = vpow.pop %v903
        %v905 = vmul.f32 %v893, 1.442695
        %v906 = vpow.pop %v905
        %v907 = vmul.f32 %v894, 1.442695
        %v908 = vpow.pop %v907
        %v909 = vmul.f32 %v895, 1.442695
        %v910 = vpow.pop %v909
        %v911 = vmul.f32 %v896, 1.442695
        %v912 = vpow.pop %v911
        %914 = vset.pattern.permute.xlu0 0
        %915 = vperm.xlu0 %914, %v881
        %v916 = vpop.permute.xlu0 %915
        %919 = vset.pattern.permute.xlu0 0
        %920 = vperm.xlu0 %919, %v882
        %v921 = vpop.permute.xlu0 %920
        %924 = vset.pattern.permute.xlu0 0
        %925 = vperm.xlu0 %924, %v883
        %v926 = vpop.permute.xlu0 %925
        %929 = vset.pattern.permute.xlu0 0
        %930 = vperm.xlu0 %929, %v884
        %v931 = vpop.permute.xlu0 %930
        %934 = vset.pattern.permute.xlu0 0
        %935 = vperm.xlu0 %934, %v885
        %v936 = vpop.permute.xlu0 %935
        %939 = vset.pattern.permute.xlu0 0
        %940 = vperm.xlu0 %939, %v886
        %v941 = vpop.permute.xlu0 %940
        %944 = vset.pattern.permute.xlu0 0
        %945 = vperm.xlu0 %944, %v887
        %v946 = vpop.permute.xlu0 %945
        %949 = vset.pattern.permute.xlu0 0
        %950 = vperm.xlu0 %949, %v888
        %v951 = vpop.permute.xlu0 %950
        %v953 = vsub.f32 %v717, %v916
        %v954 = vsub.f32 %v720, %v921
        %v955 = vsub.f32 %v725, %v926
        %v956 = vsub.f32 %v728, %v931
        %v957 = vsub.f32 %v733, %v936
        %v958 = vsub.f32 %v736, %v941
        %v959 = vsub.f32 %v741, %v946
        %v960 = vsub.f32 %v744, %v951
        %v961 = vmul.f32 %v953, 1.442695
        %v962 = vpow.pop %v961
        %v963 = vmul.f32 %v954, 1.442695
        %v964 = vpow.pop %v963
        %v965 = vmul.f32 %v955, 1.442695
        %v966 = vpow.pop %v965
        %v967 = vmul.f32 %v956, 1.442695
        %v968 = vpow.pop %v967
        %v969 = vmul.f32 %v957, 1.442695
        %v970 = vpow.pop %v969
        %v971 = vmul.f32 %v958, 1.442695
        %v972 = vpow.pop %v971
        %v973 = vmul.f32 %v959, 1.442695
        %v974 = vpow.pop %v973
        %v975 = vmul.f32 %v960, 1.442695
        %v976 = vpow.pop %v975
        %v977 = vsel %vm780, 1, 0
        %v978 = vsel %vm781, 1, 0
        %v979 = vsel %vm782, 1, 0
        %v980 = vsel %vm783, 1, 0
        %v981 = vsel %vm784, 1, 0
        %v982 = vsel %vm785, 1, 0
        %v983 = vsel %vm786, 1, 0
        %v984 = vsel %vm787, 1, 0
        %v985 = vcvt.s32.f32 %v977
        %v986 = vcvt.s32.f32 %v978
        %v987 = vcvt.s32.f32 %v979
        %v988 = vcvt.s32.f32 %v980
        %v989 = vcvt.s32.f32 %v981
        %v990 = vcvt.s32.f32 %v982
        %v991 = vcvt.s32.f32 %v983
        %v992 = vcvt.s32.f32 %v984
        %v993 = vmul.f32 %v962, %v985
        %v994 = vmul.f32 %v964, %v986
        %v995 = vmul.f32 %v966, %v987
        %v996 = vmul.f32 %v968, %v988
        %v997 = vmul.f32 %v970, %v989
        %v998 = vmul.f32 %v972, %v990
        %v999 = vmul.f32 %v974, %v991
        %v1000 = vmul.f32 %v976, %v992
        %v1001 = vld [vmem:[#allocation3] sm:$0xff]
        %v1002 = vld [vmem:[#allocation3 + $0x8] sm:$0xff]
        %v1003 = vld [vmem:[#allocation3 + $0x10] sm:$0xff]
        %v1004 = vld [vmem:[#allocation3 + $0x18] sm:$0xff]
        %v1005 = vld [vmem:[#allocation3 + $0x20] sm:$0xff]
        %v1006 = vld [vmem:[#allocation3 + $0x28] sm:$0xff]
        %v1007 = vld [vmem:[#allocation3 + $0x30] sm:$0xff]
        %v1008 = vld [vmem:[#allocation3 + $0x38] sm:$0xff]
        %v1009 = vmul.f32 %v898, %v1001
        %v1010 = vmul.f32 %v900, %v1002
        %v1011 = vmul.f32 %v902, %v1003
        %v1012 = vmul.f32 %v904, %v1004
        %v1013 = vmul.f32 %v906, %v1005
        %v1014 = vmul.f32 %v908, %v1006
        %v1015 = vmul.f32 %v910, %v1007
        %v1016 = vmul.f32 %v912, %v1008
        %1017 = vadd.xlane.f32.xlu0 %v993
        %v1018 = vpop.xlane.xlu0 %1017
        %1019 = vadd.xlane.f32.xlu0 %v994
        %v1020 = vpop.xlane.xlu0 %1019
        %1021 = vadd.xlane.f32.xlu0 %v995
        %v1022 = vpop.xlane.xlu0 %1021
        %1023 = vadd.xlane.f32.xlu0 %v996
        %v1024 = vpop.xlane.xlu0 %1023
        %1025 = vadd.xlane.f32.xlu0 %v997
        %v1026 = vpop.xlane.xlu0 %1025
        %1027 = vadd.xlane.f32.xlu0 %v998
        %v1028 = vpop.xlane.xlu0 %1027
        %1029 = vadd.xlane.f32.xlu0 %v999
        %v1030 = vpop.xlane.xlu0 %1029
        %1031 = vadd.xlane.f32.xlu0 %v1000
        %v1032 = vpop.xlane.xlu0 %1031
        %v1033 = vadd.f32 %v1009, %v1018
        %v1034 = vadd.f32 %v1010, %v1020
        %v1035 = vadd.f32 %v1011, %v1022
        %v1036 = vadd.f32 %v1012, %v1024
        %v1037 = vadd.f32 %v1013, %v1026
        %v1038 = vadd.f32 %v1014, %v1028
        %v1039 = vadd.f32 %v1015, %v1030
        %v1040 = vadd.f32 %v1016, %v1032
        %vm1041 = vcmask 7168
        %1042 = vst.msk [vmem:[#allocation3] sm:$0xff] %vm1041, %v1033
        %1043 = vst.msk [vmem:[#allocation3 + $0x8] sm:$0xff] %vm1041, %v1034
        %1044 = vst.msk [vmem:[#allocation3 + $0x10] sm:$0xff] %vm1041, %v1035
        %1045 = vst.msk [vmem:[#allocation3 + $0x18] sm:$0xff] %vm1041, %v1036
        %1046 = vst.msk [vmem:[#allocation3 + $0x20] sm:$0xff] %vm1041, %v1037
        %1047 = vst.msk [vmem:[#allocation3 + $0x28] sm:$0xff] %vm1041, %v1038
        %1048 = vst.msk [vmem:[#allocation3 + $0x30] sm:$0xff] %vm1041, %v1039
        %1049 = vst.msk [vmem:[#allocation3 + $0x38] sm:$0xff] %vm1041, %v1040
        %1050 = vst.msk [vmem:[#allocation2] sm:$0xff] %vm1041, %v881
        %1051 = vst.msk [vmem:[#allocation2 + $0x8] sm:$0xff] %vm1041, %v882
        %1052 = vst.msk [vmem:[#allocation2 + $0x10] sm:$0xff] %vm1041, %v883
        %1053 = vst.msk [vmem:[#allocation2 + $0x18] sm:$0xff] %vm1041, %v884
        %1054 = vst.msk [vmem:[#allocation2 + $0x20] sm:$0xff] %vm1041, %v885
        %1055 = vst.msk [vmem:[#allocation2 + $0x28] sm:$0xff] %vm1041, %v886
        %1056 = vst.msk [vmem:[#allocation2 + $0x30] sm:$0xff] %vm1041, %v887
        %1057 = vst.msk [vmem:[#allocation2 + $0x38] sm:$0xff] %vm1041, %v888
        %v1058 = vld [vmem:[#allocation4] sm:$0xff]
        %v1059 = vld [vmem:[#allocation4 + $0x8] sm:$0xff]
        %v1060 = vld [vmem:[#allocation4 + $0x10] sm:$0xff]
        %v1061 = vld [vmem:[#allocation4 + $0x18] sm:$0xff]
        %v1062 = vld [vmem:[#allocation4 + $0x20] sm:$0xff]
        %v1063 = vld [vmem:[#allocation4 + $0x28] sm:$0xff]
        %v1064 = vld [vmem:[#allocation4 + $0x30] sm:$0xff]
        %v1065 = vld [vmem:[#allocation4 + $0x38] sm:$0xff]
        %v1066 = vmul.f32 %v849, %v717
        %v1067 = vmul.f32 %v850, %v720
        %v1068 = vmul.f32 %v851, %v725
        %v1069 = vmul.f32 %v852, %v728
        %v1070 = vmul.f32 %v853, %v733
        %v1071 = vmul.f32 %v854, %v736
        %v1072 = vmul.f32 %v855, %v741
        %v1073 = vmul.f32 %v856, %v744
        %1074 = vadd.xlane.f32.xlu0 %v1066
        %v1075 = vpop.xlane.xlu0 %1074
        %1076 = vadd.xlane.f32.xlu0 %v1067
        %v1077 = vpop.xlane.xlu0 %1076
        %1078 = vadd.xlane.f32.xlu0 %v1068
        %v1079 = vpop.xlane.xlu0 %1078
        %1080 = vadd.xlane.f32.xlu0 %v1069
        %v1081 = vpop.xlane.xlu0 %1080
        %1082 = vadd.xlane.f32.xlu0 %v1070
        %v1083 = vpop.xlane.xlu0 %1082
        %1084 = vadd.xlane.f32.xlu0 %v1071
        %v1085 = vpop.xlane.xlu0 %1084
        %1086 = vadd.xlane.f32.xlu0 %v1072
        %v1087 = vpop.xlane.xlu0 %1086
        %1088 = vadd.xlane.f32.xlu0 %v1073
        %v1089 = vpop.xlane.xlu0 %1088
        %v1090 = vadd.f32 %v1058, %v1075
        %v1091 = vadd.f32 %v1059, %v1077
        %v1092 = vadd.f32 %v1060, %v1079
        %v1093 = vadd.f32 %v1061, %v1081
        %v1094 = vadd.f32 %v1062, %v1083
        %v1095 = vadd.f32 %v1063, %v1085
        %v1096 = vadd.f32 %v1064, %v1087
        %v1097 = vadd.f32 %v1065, %v1089
        %1098 = vst.msk [vmem:[#allocation4] sm:$0xff] %vm1041, %v1090
        %1099 = vst.msk [vmem:[#allocation4 + $0x8] sm:$0xff] %vm1041, %v1091
        %1100 = vst.msk [vmem:[#allocation4 + $0x10] sm:$0xff] %vm1041, %v1092
        %1101 = vst.msk [vmem:[#allocation4 + $0x18] sm:$0xff] %vm1041, %v1093
        %1102 = vst.msk [vmem:[#allocation4 + $0x20] sm:$0xff] %vm1041, %v1094
        %1103 = vst.msk [vmem:[#allocation4 + $0x28] sm:$0xff] %vm1041, %v1095
        %1104 = vst.msk [vmem:[#allocation4 + $0x30] sm:$0xff] %vm1041, %v1096
        %1105 = vst.msk [vmem:[#allocation4 + $0x38] sm:$0xff] %vm1041, %v1097
        %v1106 = vld [vmem:[#allocation5] sm:$0xff]
        %v1107 = vld [vmem:[#allocation5 + $0x8] sm:$0xff]
        %v1108 = vld [vmem:[#allocation5 + $0x10] sm:$0xff]
        %v1109 = vld [vmem:[#allocation5 + $0x18] sm:$0xff]
        %v1110 = vld [vmem:[#allocation5 + $0x20] sm:$0xff]
        %v1111 = vld [vmem:[#allocation5 + $0x28] sm:$0xff]
        %v1112 = vld [vmem:[#allocation5 + $0x30] sm:$0xff]
        %v1113 = vld [vmem:[#allocation5 + $0x38] sm:$0xff]
        %1114 = vadd.xlane.f32.xlu0 %v849
        %v1115 = vpop.xlane.xlu0 %1114
        %1116 = vadd.xlane.f32.xlu0 %v850
        %v1117 = vpop.xlane.xlu0 %1116
        %1118 = vadd.xlane.f32.xlu0 %v851
        %v1119 = vpop.xlane.xlu0 %1118
        %1120 = vadd.xlane.f32.xlu0 %v852
        %v1121 = vpop.xlane.xlu0 %1120
        %1122 = vadd.xlane.f32.xlu0 %v853
        %v1123 = vpop.xlane.xlu0 %1122
        %1124 = vadd.xlane.f32.xlu0 %v854
        %v1125 = vpop.xlane.xlu0 %1124
        %1126 = vadd.xlane.f32.xlu0 %v855
        %v1127 = vpop.xlane.xlu0 %1126
        %1128 = vadd.xlane.f32.xlu0 %v856
        %v1129 = vpop.xlane.xlu0 %1128
        %v1130 = vadd.f32 %v1106, %v1115
        %v1131 = vadd.f32 %v1107, %v1117
        %v1132 = vadd.f32 %v1108, %v1119
        %v1133 = vadd.f32 %v1109, %v1121
        %v1134 = vadd.f32 %v1110, %v1123
        %v1135 = vadd.f32 %v1111, %v1125
        %v1136 = vadd.f32 %v1112, %v1127
        %v1137 = vadd.f32 %v1113, %v1129
        %1138 = vst.msk [vmem:[#allocation5] sm:$0xff] %vm1041, %v1130
        %1139 = vst.msk [vmem:[#allocation5 + $0x8] sm:$0xff] %vm1041, %v1131
        %1140 = vst.msk [vmem:[#allocation5 + $0x10] sm:$0xff] %vm1041, %v1132
        %1141 = vst.msk [vmem:[#allocation5 + $0x18] sm:$0xff] %vm1041, %v1133
        %1142 = vst.msk [vmem:[#allocation5 + $0x20] sm:$0xff] %vm1041, %v1134
        %1143 = vst.msk [vmem:[#allocation5 + $0x28] sm:$0xff] %vm1041, %v1135
        %1144 = vst.msk [vmem:[#allocation5 + $0x30] sm:$0xff] %vm1041, %v1136
        %1145 = vst.msk [vmem:[#allocation5 + $0x38] sm:$0xff] %vm1041, %v1137
        // Predicated region
        $region49: #{tpu_custom_call.1} parent=35 // pred_check
          %p1146 = pneg %p292
        $region50: #{tpu_custom_call.1} parent=35 // pred_check_branch
          %1148 = sbr.rel (%p1146) target = $region52
        $region51: #{tpu_custom_call.1} parent=35 // pred_region
          %v1149 = vld [vmem:[#allocation2] sm:$0xff]
          %v1150 = vld [vmem:[#allocation2 + $0x8] sm:$0xff]
          %v1151 = vld [vmem:[#allocation2 + $0x10] sm:$0xff]
          %v1152 = vld [vmem:[#allocation2 + $0x18] sm:$0xff]
          %v1153 = vld [vmem:[#allocation2 + $0x20] sm:$0xff]
          %v1154 = vld [vmem:[#allocation2 + $0x28] sm:$0xff]
          %v1155 = vld [vmem:[#allocation2 + $0x30] sm:$0xff]
          %v1156 = vld [vmem:[#allocation2 + $0x38] sm:$0xff]
          %v1157 = vld [vmem:[#allocation3] sm:$0xff]
          %v1158 = vld [vmem:[#allocation3 + $0x8] sm:$0xff]
          %v1159 = vld [vmem:[#allocation3 + $0x10] sm:$0xff]
          %v1160 = vld [vmem:[#allocation3 + $0x18] sm:$0xff]
          %v1161 = vld [vmem:[#allocation3 + $0x20] sm:$0xff]
          %v1162 = vld [vmem:[#allocation3 + $0x28] sm:$0xff]
          %v1163 = vld [vmem:[#allocation3 + $0x30] sm:$0xff]
          %v1164 = vld [vmem:[#allocation3 + $0x38] sm:$0xff]
          %v1165 = vlog2.pop %v1157
          %v1166 = vmul.f32 %v1165, 0.6931472
          %v1167 = vlog2.pop %v1158
          %v1168 = vmul.f32 %v1167, 0.6931472
          %v1169 = vlog2.pop %v1159
          %v1170 = vmul.f32 %v1169, 0.6931472
          %v1171 = vlog2.pop %v1160
          %v1172 = vmul.f32 %v1171, 0.6931472
          %v1173 = vlog2.pop %v1161
          %v1174 = vmul.f32 %v1173, 0.6931472
          %v1175 = vlog2.pop %v1162
          %v1176 = vmul.f32 %v1175, 0.6931472
          %v1177 = vlog2.pop %v1163
          %v1178 = vmul.f32 %v1177, 0.6931472
          %v1179 = vlog2.pop %v1164
          %v1180 = vmul.f32 %v1179, 0.6931472
          %v1181 = vadd.f32 %v1149, %v1166
          %v1182 = vadd.f32 %v1150, %v1168
          %v1183 = vadd.f32 %v1151, %v1170
          %v1184 = vadd.f32 %v1152, %v1172
          %v1185 = vadd.f32 %v1153, %v1174
          %v1186 = vadd.f32 %v1154, %v1176
          %v1187 = vadd.f32 %v1155, %v1178
          %v1188 = vadd.f32 %v1156, %v1180
          %v1189 = vld [vmem:[#allocation5] sm:$0xff]
          %v1190 = vld [vmem:[#allocation5 + $0x8] sm:$0xff]
          %v1191 = vld [vmem:[#allocation5 + $0x10] sm:$0xff]
          %v1192 = vld [vmem:[#allocation5 + $0x18] sm:$0xff]
          %v1193 = vld [vmem:[#allocation5 + $0x20] sm:$0xff]
          %v1194 = vld [vmem:[#allocation5 + $0x28] sm:$0xff]
          %v1195 = vld [vmem:[#allocation5 + $0x30] sm:$0xff]
          %v1196 = vld [vmem:[#allocation5 + $0x38] sm:$0xff]
          %v1197 = vld [vmem:[#allocation4] sm:$0xff]
          %v1198 = vld [vmem:[#allocation4 + $0x8] sm:$0xff]
          %v1199 = vld [vmem:[#allocation4 + $0x10] sm:$0xff]
          %v1200 = vld [vmem:[#allocation4 + $0x18] sm:$0xff]
          %v1201 = vld [vmem:[#allocation4 + $0x20] sm:$0xff]
          %v1202 = vld [vmem:[#allocation4 + $0x28] sm:$0xff]
          %v1203 = vld [vmem:[#allocation4 + $0x30] sm:$0xff]
          %v1204 = vld [vmem:[#allocation4 + $0x38] sm:$0xff]
          %v1205 = vmul.f32 %v1189, %v1181
          %v1206 = vmul.f32 %v1190, %v1182
          %v1207 = vmul.f32 %v1191, %v1183
          %v1208 = vmul.f32 %v1192, %v1184
          %v1209 = vmul.f32 %v1193, %v1185
          %v1210 = vmul.f32 %v1194, %v1186
          %v1211 = vmul.f32 %v1195, %v1187
          %v1212 = vmul.f32 %v1196, %v1188
          %v1213 = vsub.f32 %v1197, %v1205
          %v1214 = vsub.f32 %v1198, %v1206
          %v1215 = vsub.f32 %v1199, %v1207
          %v1216 = vsub.f32 %v1200, %v1208
          %v1217 = vsub.f32 %v1201, %v1209
          %v1218 = vsub.f32 %v1202, %v1210
          %v1219 = vsub.f32 %v1203, %v1211
          %v1220 = vsub.f32 %v1204, %v1212
          %v1221 = vmax.f32 %v1189, 1.0
          %v1222 = vmax.f32 %v1190, 1.0
          %v1223 = vmax.f32 %v1191, 1.0
          %v1224 = vmax.f32 %v1192, 1.0
          %v1225 = vmax.f32 %v1193, 1.0
          %v1226 = vmax.f32 %v1194, 1.0
          %v1227 = vmax.f32 %v1195, 1.0
          %v1228 = vmax.f32 %v1196, 1.0
          %v1229 = vrcp.pop %v1221
          %v1230 = vmul.f32 %v1213, %v1229
          %v1231 = vrcp.pop %v1222
          %v1232 = vmul.f32 %v1214, %v1231
          %v1233 = vrcp.pop %v1223
          %v1234 = vmul.f32 %v1215, %v1233
          %v1235 = vrcp.pop %v1224
          %v1236 = vmul.f32 %v1216, %v1235
          %v1237 = vrcp.pop %v1225
          %v1238 = vmul.f32 %v1217, %v1237
          %v1239 = vrcp.pop %v1226
          %v1240 = vmul.f32 %v1218, %v1239
          %v1241 = vrcp.pop %v1227
          %v1242 = vmul.f32 %v1219, %v1241
          %v1243 = vrcp.pop %v1228
          %v1244 = vmul.f32 %v1220, %v1243
          %vm1245 = vcmp.lt.s32.totalorder %v758, 8
          %vm1246 = vcmp.lt.s32.totalorder %v759, 8
          %vm1247 = vcmp.lt.s32.totalorder %v760, 8
          %vm1248 = vcmp.lt.s32.totalorder %v761, 8
          %vm1249 = vcmp.lt.s32.totalorder %v762, 8
          %vm1250 = vcmp.lt.s32.totalorder %v763, 8
          %vm1251 = vcmp.lt.s32.totalorder %v764, 8
          %vm1252 = vcmp.lt.s32.totalorder %v765, 8
          %v1253 = vsel %vm1245, %v1230, 0.0
          %v1254 = vsel %vm1246, %v1232, 0.0
          %v1255 = vsel %vm1247, %v1234, 0.0
          %v1256 = vsel %vm1248, %v1236, 0.0
          %v1257 = vsel %vm1249, %v1238, 0.0
          %v1258 = vsel %vm1250, %v1240, 0.0
          %v1259 = vsel %vm1251, %v1242, 0.0
          %v1260 = vsel %vm1252, %v1244, 0.0
          %v1261 = vsel %vm1041, %v1253, 0.0
          %v1262 = vsel %vm1041, %v1254, 0.0
          %v1263 = vadd.f32 %v1261, %v1262
          %v1264 = vsel %vm1041, %v1255, 0.0
          %v1265 = vadd.f32 %v1263, %v1264
          %v1266 = vsel %vm1041, %v1256, 0.0
          %v1267 = vadd.f32 %v1265, %v1266
          %v1268 = vsel %vm1041, %v1257, 0.0
          %v1269 = vadd.f32 %v1267, %v1268
          %v1270 = vsel %vm1041, %v1258, 0.0
          %v1271 = vadd.f32 %v1269, %v1270
          %v1272 = vsel %vm1041, %v1259, 0.0
          %v1273 = vadd.f32 %v1271, %v1272
          %v1274 = vsel %vm1041, %v1260, 0.0
          %v1275 = vadd.f32 %v1273, %v1274
          %1276 = vadd.xlane.f32.xlu0 %v1275
          %v1277 = vpop.xlane.xlu0 %1276
          %v1278 = vrot.slane %v1277, 4
          %v1279 = vadd.f32 %v1277, %v1278
          %v1280 = vrot.slane %v1279, 2
          %v1281 = vadd.f32 %v1279, %v1280
          %v1282 = vrot.slane %v1281, 1
          %v1283 = vadd.f32 %v1281, %v1282
          %s1284 = vtos %v1283
          %v1285 = vstv %s1284
          %1286 = vst [vmem:[%s279] sm:$0xff] %v1285
        $region52: #{tpu_custom_call.1} parent=35 // pred_fallthru
          _
        %s1287 = sand.u32 %s146, 1
        %s1288 = scalar_lea.sflag [#allocation8], %s1287
        %s1289 = sand.u32 %s146, 1
        %s1290 = smul.addr %s1289, 8
        %s1291 = scalar_lea.vmem [#allocation11], %s1290
        // Predicated region
        $region53: #{tpu_custom_call.1} parent=35 // pred_check
          %p1292 = pneg %p156
        $region54: #{tpu_custom_call.1} parent=35 // pred_check_branch
          %1294 = sbr.rel (%p1292) target = $region56
        $region55: #{tpu_custom_call.1} parent=35 // pred_region
          %s1296 = ssub.s32 128, 128
          %1297 = vsyncadd %s1288, %s1296
          %s1298 = smul.addr %s26, 128
          %s1299 = scalar_lea.hbm %s4, %s1298
          %s1301 = sshll.u32 %s1291, 4
          %s1302 = int_to_ptr.vmem [resolvable:$true] %s1301
          %1304 = dma.vmem_to_hbm [thread:$0]  %s1302, 128, %s1299, %s1288
        $region56: #{tpu_custom_call.1} parent=35 // pred_fallthru
          _
      $region36: #{tpu_custom_call.1} parent=5 // pred_fallthru
        _
      %p1305 = scmp.le.s32.totalorder 2, %s17
      // Predicated region
      $region57: #{tpu_custom_call.1} parent=5 // pred_check
        %p1306 = pneg %p1305
      $region58: #{tpu_custom_call.1} parent=5 // pred_check_branch
        %1308 = sbr.rel (%p1306) target = $region60
      $region59: #{tpu_custom_call.1} parent=5 // pred_region
        %s1309 = ssub.s32 %s17, 2
        // Predicated region
        $region61: #{tpu_custom_call.1} parent=59 // pred_check
          %p1310 = pneg %p162
        $region62: #{tpu_custom_call.1} parent=59 // pred_check_branch
          %1312 = sbr.rel (%p1310) target = $region64
        $region63: #{tpu_custom_call.1} parent=59 // pred_region
          %s1313 = sand.u32 %s147, 1
          %s1314 = scalar_lea.sflag [#allocation8], %s1313
          %s1315 = sand.u32 %s147, 1
          %s1316 = smul.addr %s1315, 8
          %s1317 = scalar_lea.vmem [#allocation11], %s1316
          %1318 = dma.done %s1314, 128
        $region64: #{tpu_custom_call.1} parent=59 // pred_fallthru
          _
      $region60: #{tpu_custom_call.1} parent=5 // pred_fallthru
        _
    $region6: #{tpu_custom_call.1} parent=1 // loop_footer
      %s21 = sadd.s32 1, %s17
    $region7: #{tpu_custom_call.1} parent=1 // loop_footer_branch
      %16 = sbr.rel target = $region3
    $region8: #{tpu_custom_call.1} parent=1 // loop_exit
      _
    %1319 = vsyncpa [#allocation7], 1
    %s1320 = scalar_lea.sflag [#allocation7], 1
    %1321 = vsyncpa %s1320, 1
    %1322 = vsyncpa [#allocation10], 1
    %1323 = vsyncpa [#allocation8], 1
    %s1324 = scalar_lea.sflag [#allocation8], 1
    %1325 = vsyncpa %s1324, 1

</llo_original>
